<compile_context>
chip_gen: v6e
topology: v6e:2x2x1
jax: 0.10.0
libtpu: 0.0.40
codegen_flags: <defaults>
</compile_context>

<pallas_src>
import math

import jax
import jax.numpy as jnp
from jax import lax
from jax.experimental import pallas as pl
from jax.experimental.pallas import tpu as pltpu


# ----------------------------- linear projection ---------------------------- #

def _linear_kernel(x_ref, w_ref, b_ref, o_ref):
    # x: (tm, K) bf16, w: (K, N) bf16, b: (1, N) f32  ->  o: (tm, N) out_dtype
    o_ref[...] = (jnp.dot(x_ref[...], w_ref[...],
                          preferred_element_type=jnp.float32)
                  + b_ref[...]).astype(o_ref.dtype)


def pallas_linear(x, w_t, b, *, tile_m=512, out_dtype=jnp.float32):
    """y = x @ w_t + b, with w_t pre-transposed to (K, N); bf16 MXU, f32 accum.

    Large M tiles (512 rows) so the per-grid-step overhead is amortized and the
    streaming value projection approaches the HBM roofline."""
    M, K = x.shape
    N = w_t.shape[1]
    tm = min(tile_m, ((M + 127) // 128) * 128)
    Mp = ((M + tm - 1) // tm) * tm
    xp = x if Mp == M else jnp.pad(x, ((0, Mp - M), (0, 0)))
    out = pl.pallas_call(
        _linear_kernel,
        grid=(Mp // tm,),
        in_specs=[pl.BlockSpec((tm, K), lambda i: (i, 0)),
                  pl.BlockSpec((K, N), lambda i: (0, 0)),
                  pl.BlockSpec((1, N), lambda i: (0, 0))],
        out_specs=pl.BlockSpec((tm, N), lambda i: (i, 0)),
        out_shape=jax.ShapeDtypeStruct((Mp, N), out_dtype),
        compiler_params=pltpu.CompilerParams(
            dimension_semantics=("parallel",)),
    )(xp.astype(jnp.bfloat16), w_t.astype(jnp.bfloat16),
      b.reshape(1, N).astype(jnp.float32))
    return out if Mp == M else out[:M]


# --------------------------- deformable-sampling core ----------------------- #

def _make_deform_kernel(head_dim, num_points, hwz, q_tile):
    """Per-(batch, head, Q-tile) kernel.
    loc_ref: (4, P*TQ) f32, rows = (x, y, z, attn_w), lane = p*TQ + q.
    val_ref: (Zp*D, Hp*Wp) bf16, zero-padded ring, transposed.
    out_ref: (D, TQ) f32."""
    H, W, Z = hwz
    Hp, Wp, Zp = H + 4, W + 4, Z + 4
    HWp = Hp * Wp
    D = head_dim
    P = num_points
    TQ = q_tile
    N = P * TQ

    def kernel(loc_ref, val_ref, out_ref):
        s = loc_ref[...]                                    # (4, N) f32
        # coordinate math on full-lane rows (all points at once)
        x = s[0:1, :] * float(W) - 0.5
        y = s[1:2, :] * float(H) - 0.5
        z = s[2:3, :] * float(Z) - 0.5
        aw = s[3:4, :]

        x0f = jnp.floor(x); fx = x - x0f
        y0f = jnp.floor(y); fy = y - y0f
        z0f = jnp.floor(z); fz = z - z0f
        # padded low-corner indices; clamp once (OOB taps land on the 2-wide
        # zero pad ring -> no per-corner validity masks needed).
        x0 = jnp.clip(x0f, -2.0, float(W)).astype(jnp.int32) + 2
        y0 = jnp.clip(y0f, -2.0, float(H)).astype(jnp.int32) + 2
        z0 = jnp.clip(z0f, -2.0, float(Z)).astype(jnp.int32) + 2
        base_hw = y0 * Wp + x0                              # (1, N) int32

        w00 = (1.0 - fx) * (1.0 - fy) * aw
        w01 = fx * (1.0 - fy) * aw
        w10 = (1.0 - fx) * fy * aw
        w11 = fx * fy * aw

        # sparse xy-bilinear sampling matrix for ALL points at once: (HWp, N);
        # one subtract + nested-where chain (cheapened one-hot build).
        d = lax.broadcasted_iota(jnp.int32, (HWp, N), 0) - base_hw
        a = jnp.where(d == 0, w00,
            jnp.where(d == 1, w01,
            jnp.where(d == Wp, w10,
            jnp.where(d == Wp + 1, w11, 0.0))))
        # single MXU call per grid step: (Zp*D, HWp) @ (HWp, P*TQ), bf16 in,
        # f32 accumulation.
        g = jnp.dot(val_ref[...], a.astype(jnp.bfloat16),
                    preferred_element_type=jnp.float32)     # (Zp*D, N)

        # z interpolation: (Zp, N) two-tap weights, multiply-reduce over Zp.
        iz = lax.broadcasted_iota(jnp.int32, (Zp, N), 0)
        wz = (jnp.where(iz == z0, 1.0 - fz, 0.0)
              + jnp.where(iz == z0 + 1, fz, 0.0))           # (Zp, N)
        res = jnp.sum(g.reshape(Zp, D, N) * wz[:, None, :], axis=0)  # (D, N)

        # reduce over points (vreg-aligned static lane slices of width TQ)
        acc = res[:, 0:TQ]
        for p in range(1, P):
            acc = acc + res[:, p * TQ:(p + 1) * TQ]
        out_ref[...] = acc

    return kernel


def deform_attn_core_pallas(value_t, lx, ly, lz, attw, spatial_shapes,
                            num_points, *, q_tile=128):
    """value_t: (B, heads, V, D); lx/ly/lz/attw: (B, heads, Q, L*P) -> (B, heads, Q, D)."""
    B, Hh, V, D = value_t.shape
    Q, LP = lx.shape[2], lx.shape[3]
    assert len(spatial_shapes) == 1, "single-level spatial_shapes"
    H, W, Z = spatial_shapes[0]
    assert H * W * Z == V
    P = num_points
    assert LP == P
    Hp, Wp, Zp = H + 4, W + 4, Z + 4

    TQ = q_tile
    Qp = ((Q + TQ - 1) // TQ) * TQ
    nqt = Qp // TQ

    # pack sampling data lane-dense: (B, Hh, nqt, 4, P*TQ), lane = p*TQ + q
    locs = jnp.stack([lx, ly, lz, attw], axis=2).astype(jnp.float32)  # (B,Hh,4,Q,P)
    if Qp != Q:
        locs = jnp.pad(locs, ((0, 0), (0, 0), (0, 0), (0, Qp - Q), (0, 0)))
    locs = locs.reshape(B, Hh, 4, nqt, TQ, P)
    locs = locs.transpose(0, 1, 3, 2, 5, 4).reshape(B, Hh, nqt, 4, P * TQ)

    # value: 2-voxel zero pad ring; per-head layout (Zp*D, Hp*Wp) in bf16.
    v = value_t.reshape(B, Hh, H, W, Z, D)
    v = jnp.pad(v, ((0, 0), (0, 0), (2, 2), (2, 2), (2, 2), (0, 0)))
    v = v.transpose(0, 1, 4, 5, 2, 3).reshape(B, Hh, Zp * D, Hp * Wp)
    v = v.astype(jnp.bfloat16)

    kernel = _make_deform_kernel(D, P, (H, W, Z), TQ)
    out = pl.pallas_call(
        kernel,
        grid=(B, Hh, nqt),
        in_specs=[
            pl.BlockSpec((None, None, None, 4, P * TQ),
                         lambda b, h, qt: (b, h, qt, 0, 0)),
            pl.BlockSpec((None, None, Zp * D, Hp * Wp),
                         lambda b, h, qt: (b, h, 0, 0)),
        ],
        out_specs=pl.BlockSpec((None, None, D, TQ),
                               lambda b, h, qt: (b, h, 0, qt)),
        out_shape=jax.ShapeDtypeStruct((B, Hh, D, Qp), jnp.float32),
        compiler_params=pltpu.CompilerParams(
            dimension_semantics=("parallel", "parallel", "parallel")),
    )(locs, v)
    out = out[..., :Q]                        # (B, Hh, D, Q)
    return out.transpose(0, 1, 3, 2)          # (B, Hh, Q, D)


# ------------------------- pure-JAX core reference ------------------------- #

def deform_attn_core_reference(value_t, lx, ly, lz, attw, spatial_shapes,
                               num_points, match_bf16=True):
    """Independent gather-based reference (grid_sample zero-padding semantics).
    With match_bf16=True the value and per-corner xy weights are rounded to bf16
    to mirror the kernel's declared MXU precision (accumulation stays f32)."""
    B, Hh, V, D = value_t.shape
    Q = lx.shape[2]
    vq = value_t
    if match_bf16:
        vq = value_t.astype(jnp.bfloat16).astype(jnp.float32)
    out = jnp.zeros((B, Hh, Q, D), jnp.float32)
    lvl_start = 0
    for l, (H_, W_, Z_) in enumerate(spatial_shapes):
        for p in range(num_points):
            c = l * num_points + p
            x = lx[..., c] * W_ - 0.5
            y = ly[..., c] * H_ - 0.5
            z = lz[..., c] * Z_ - 0.5
            aw = attw[..., c]
            x0f, y0f, z0f = jnp.floor(x), jnp.floor(y), jnp.floor(z)
            fx, fy, fz = x - x0f, y - y0f, z - z0f
            x0, y0, z0 = (x0f.astype(jnp.int32), y0f.astype(jnp.int32),
                          z0f.astype(jnp.int32))
            for dy in (0, 1):
                yi = y0 + dy
                wy = fy if dy else (1.0 - fy)
                for dx in (0, 1):
                    xi = x0 + dx
                    wx = fx if dx else (1.0 - fx)
                    wxy = wx * wy * aw
                    if match_bf16:
                        wxy = wxy.astype(jnp.bfloat16).astype(jnp.float32)
                    for dz in (0, 1):
                        zi = z0 + dz
                        wz = fz if dz else (1.0 - fz)
                        valid = ((xi >= 0) & (xi < W_) & (yi >= 0) & (yi < H_) &
                                 (zi >= 0) & (zi < Z_))
                        idx = lvl_start + (jnp.clip(yi, 0, H_ - 1) * W_ +
                                           jnp.clip(xi, 0, W_ - 1)) * Z_ + \
                            jnp.clip(zi, 0, Z_ - 1)
                        gathered = jnp.take_along_axis(
                            vq,
                            jnp.broadcast_to(idx[..., None], (B, Hh, Q, D)),
                            axis=2)
                        out = out + (jnp.where(valid, wz, 0.0) * wxy)[..., None] * gathered
        lvl_start += H_ * W_ * Z_
    return out


# ------------------------------ module wrapper ------------------------------ #

def _xavier_uniform(key, shape):
    fan_out, fan_in = shape
    a = math.sqrt(6.0 / (fan_in + fan_out))
    return jax.random.uniform(key, shape, jnp.float32, -a, a)


class DeformSelfAttention3DCustomPallas:
    def __init__(self, key, embed_dims=32, num_heads=4, num_levels=1,
                 num_points=4, num_bev_queue=1, bev_hwz=(8, 8, 4)):
        assert embed_dims % num_heads == 0
        assert num_levels == 1, "single-level spatial_shapes (see module forward)"
        # TODO(synk): the fused query projection reshape below assumes nbq == 1;
        # nbq > 1 needs a (bs, Q, E*nbq) query and a joint-softmax check.
        assert num_bev_queue == 1
        self.embed_dims = embed_dims
        self.num_heads = num_heads
        self.num_levels = num_levels
        self.num_points = num_points
        self.num_bev_queue = num_bev_queue
        H, W, Z = bev_hwz
        self.spatial_shapes = ((H, W, Z),)

        E, L, P, nbq = embed_dims, num_levels, num_points, num_bev_queue
        kv, ko = jax.random.split(key, 2)

        # sampling_offsets bias = grid_init (torch init_weights); weights are 0.
        thetas = jnp.arange(num_heads, dtype=jnp.float32) * (2.0 * math.pi / num_heads)
        grid_init = jnp.stack([jnp.cos(thetas), jnp.sin(thetas), thetas * 0.0], -1)
        grid_init = grid_init / jnp.max(jnp.abs(grid_init), axis=-1, keepdims=True)
        grid_init = jnp.tile(grid_init.reshape(num_heads, 1, 1, 3), (1, L * nbq, P, 1))
        grid_init = grid_init * jnp.arange(1, P + 1, dtype=jnp.float32).reshape(1, 1, P, 1)
        b_off = grid_init.reshape(-1)

        # fused sampling_offsets + attention_weights projection (both have zero
        # weights after init, so the fused weight is zero and only bias matters).
        self.n_off = nbq * num_heads * L * P * 3
        self.n_attn = nbq * num_heads * L * P
        self.W_qproj_t = jnp.zeros((E * nbq, self.n_off + self.n_attn), jnp.bfloat16)
        self.b_qproj = jnp.concatenate(
            [b_off, jnp.zeros((self.n_attn,), jnp.float32)])

        # value_proj / output_proj: xavier uniform, zero bias; pre-transposed +
        # pre-cast to bf16 once (module constants, not per-call work).
        self.Wv_t = jnp.transpose(_xavier_uniform(kv, (E, E))).astype(jnp.bfloat16)
        self.bv = jnp.zeros((E,), jnp.float32)
        self.Wout_t = jnp.transpose(_xavier_uniform(ko, (E, E))).astype(jnp.bfloat16)
        self.bout = jnp.zeros((E,), jnp.float32)

    def __call__(self, query, value=None, identity=None, query_pos=None,
                 reference_points=None):
        if value is None:
            bs, len_bev, c = query.shape
            value = jnp.stack([query, query], 1).reshape(bs * 2, len_bev, c)
        if identity is None:
            identity = query
        if query_pos is not None:
            query = query + query_pos

        bs, num_query, embed_dims = query.shape
        _, num_value, _ = value.shape
        assert sum(h * w * z for h, w, z in self.spatial_shapes) == num_value
        assert reference_points.shape[-1] == 3

        nbq, heads, L, P = (self.num_bev_queue, self.num_heads,
                            self.num_levels, self.num_points)
        B = bs * nbq

        # value projection (M-tiled Pallas matmul, bf16 output -> halves HBM
        # writeback and the re-read for the pad/transpose below)
        value_p = pallas_linear(value.reshape(-1, embed_dims), self.Wv_t, self.bv,
                                out_dtype=jnp.bfloat16)
        value_p = value_p.reshape(B, num_value, heads, -1)
        head_dim = value_p.shape[-1]

        # fused sampling-offset + attention-weight projection
        q2d = query.reshape(bs * num_query, embed_dims * nbq)
        proj = pallas_linear(q2d, self.W_qproj_t, self.b_qproj)
        off = proj[:, :self.n_off].reshape(bs, num_query, heads, nbq, L, P, 3)
        attw = proj[:, self.n_off:].reshape(bs, num_query, heads, nbq, L * P)
        attw = jax.nn.softmax(attw, axis=-1)
        attw = attw.reshape(bs, num_query, heads, nbq, L, P)
        attw = attw.transpose(0, 3, 1, 2, 4, 5).reshape(B, num_query, heads, L, P)
        off = off.transpose(0, 3, 1, 2, 4, 5, 6).reshape(B, num_query, heads, L, P, 3)

        ss = jnp.array(self.spatial_shapes, jnp.float32)            # rows (H, W, Z)
        normalizer = jnp.stack([ss[:, 1], ss[:, 0], ss[:, 2]], -1)  # (W, H, Z)
        loc = (reference_points[:, :, None, :, None, :]
               + off / normalizer[None, None, None, :, None, :])    # (B,Q,h,L,P,3)

        LP = L * P
        lx = loc[..., 0].transpose(0, 2, 1, 3, 4).reshape(B, heads, num_query, LP)
        ly = loc[..., 1].transpose(0, 2, 1, 3, 4).reshape(B, heads, num_query, LP)
        lz = loc[..., 2].transpose(0, 2, 1, 3, 4).reshape(B, heads, num_query, LP)
        wflat = attw.transpose(0, 2, 1, 3, 4).reshape(B, heads, num_query, LP)
        value_t = value_p.transpose(0, 2, 1, 3)                     # (B, h, V, D) bf16

        core = deform_attn_core_pallas(value_t, lx, ly, lz, wflat,
                                       self.spatial_shapes, P)       # (B, h, Q, D)
        output = core.transpose(0, 2, 1, 3).reshape(B, num_query, heads * head_dim)

        # mirror: permute(1,2,0) -> view(Q,E,bs,nbq) -> mean(-1) -> permute(2,0,1)
        output = output.transpose(1, 2, 0).reshape(num_query, heads * head_dim, bs, nbq)
        output = output.mean(-1).transpose(2, 0, 1)                  # (bs, Q, E)

        output = pallas_linear(output.reshape(bs * num_query, -1),
                               self.Wout_t, self.bout)
        output = output.reshape(bs, num_query, self.embed_dims)

        # dropout is identity at inference time
        return output + identity


# ---------------------------------- main ----------------------------------- #

if __name__ == "__main__":
    key = jax.random.PRNGKey(0)
    k_param, k_q, k_v, k_ref, k_t1, k_t2, k_t3 = jax.random.split(key, 7)

    bs, E, heads, L, P, nbq = 2, 32, 4, 1, 4, 1
    H, W, Z = 8, 8, 4
    Q = 64
    V = H * W * Z
    D = E // heads
    spatial_shapes = ((H, W, Z),)

    # --- independent correctness check of the deformable-sampling core ---
    value_t = jax.random.normal(k_t1, (bs, heads, V, D), jnp.float32)
    locs = jax.random.uniform(k_t2, (3, bs, heads, Q, L * P), jnp.float32,
                              minval=-0.3, maxval=1.3)
    wts = jax.random.uniform(k_t3, (bs, heads, Q, L * P), jnp.float32)
    core_pl = deform_attn_core_pallas(value_t, locs[0], locs[1], locs[2], wts,
                                      spatial_shapes, P)
    core_pl = jax.block_until_ready(core_pl)
    core_ref = deform_attn_core_reference(value_t, locs[0], locs[1], locs[2], wts,
                                          spatial_shapes, P)
    max_err = float(jnp.max(jnp.abs(core_pl - core_ref)))
    assert max_err < 2e-3, f"deform core mismatch: max_err={max_err}"

    # --- full module forward ---
    module = DeformSelfAttention3DCustomPallas(
        k_param, embed_dims=E, num_heads=heads, num_levels=L, num_points=P,
        num_bev_queue=nbq, bev_hwz=(H, W, Z))
    query = jax.random.normal(k_q, (bs, Q, E), jnp.float32)
    value = jax.random.normal(k_v, (bs * nbq, V, E), jnp.float32)
    reference_points = jax.random.uniform(k_ref, (bs * nbq, Q, L, 3), jnp.float32)

    out = module(query, value=value, reference_points=reference_points)
    out = jax.block_until_ready(out)
    assert out.shape == (bs, Q, E)
    assert bool(jnp.all(jnp.isfinite(out)))
    print("KERNEL_OK")
</pallas_src>

<mosaic_0001>
module attributes {stable_mosaic.version = 11 : i64} {
  func.func @kernel(%arg0: i32, %arg1: i32, %arg2: i32, %arg3: memref<1x1x1x4x512xf32, #tpu.memory_space<vmem>>, %arg4: memref<1x1x64x144xbf16, #tpu.memory_space<vmem>>, %arg5: memref<1x1x8x128xf32, #tpu.memory_space<vmem>>) attributes {dimension_semantics = [#tpu.dimension_semantics<parallel>, #tpu.dimension_semantics<parallel>, #tpu.dimension_semantics<parallel>], iteration_bounds = array<i64: 2, 4, 1>, scalar_prefetch = 0 : i64, scratch_operands = 0 : i64, tpu.core_type = #tpu.core_type<tc>, window_params = [{transform_indices = @transform_0, window_bounds = array<i64: 1, 1, 1, 4, 512>}, {transform_indices = @transform_1, window_bounds = array<i64: 1, 1, 64, 144>}, {transform_indices = @transform_2, window_bounds = array<i64: 1, 1, 8, 128>}]} {
    %c0 = arith.constant 0 : index
    %c0_0 = arith.constant 0 : index
    %c0_1 = arith.constant 0 : index
    %c0_2 = arith.constant 0 : index
    %c0_3 = arith.constant 0 : index
    %0 = vector.load %arg3[%c0, %c0_0, %c0_1, %c0_2, %c0_3] : memref<1x1x1x4x512xf32, #tpu.memory_space<vmem>>, vector<1x1x1x4x512xf32>
    %1 = vector.shape_cast %0 : vector<1x1x1x4x512xf32> to vector<4x512xf32>
    %2 = vector.extract_strided_slice %1 {offsets = [0, 0], sizes = [1, 512], strides = [1, 1]} : vector<4x512xf32> to vector<1x512xf32>
    %cst = arith.constant 8.000000e+00 : f32
    %3 = vector.broadcast %cst : f32 to vector<1x512xf32>
    %4 = arith.mulf %2, %3 : vector<1x512xf32>
    %cst_4 = arith.constant 5.000000e-01 : f32
    %5 = vector.broadcast %cst_4 : f32 to vector<1x512xf32>
    %6 = arith.subf %4, %5 : vector<1x512xf32>
    %7 = vector.extract_strided_slice %1 {offsets = [1, 0], sizes = [1, 512], strides = [1, 1]} : vector<4x512xf32> to vector<1x512xf32>
    %cst_5 = arith.constant 8.000000e+00 : f32
    %8 = vector.broadcast %cst_5 : f32 to vector<1x512xf32>
    %9 = arith.mulf %7, %8 : vector<1x512xf32>
    %cst_6 = arith.constant 5.000000e-01 : f32
    %10 = vector.broadcast %cst_6 : f32 to vector<1x512xf32>
    %11 = arith.subf %9, %10 : vector<1x512xf32>
    %12 = vector.extract_strided_slice %1 {offsets = [2, 0], sizes = [1, 512], strides = [1, 1]} : vector<4x512xf32> to vector<1x512xf32>
    %cst_7 = arith.constant 4.000000e+00 : f32
    %13 = vector.broadcast %cst_7 : f32 to vector<1x512xf32>
    %14 = arith.mulf %12, %13 : vector<1x512xf32>
    %cst_8 = arith.constant 5.000000e-01 : f32
    %15 = vector.broadcast %cst_8 : f32 to vector<1x512xf32>
    %16 = arith.subf %14, %15 : vector<1x512xf32>
    %17 = vector.extract_strided_slice %1 {offsets = [3, 0], sizes = [1, 512], strides = [1, 1]} : vector<4x512xf32> to vector<1x512xf32>
    %18 = math.floor %6 : vector<1x512xf32>
    %19 = arith.subf %6, %18 : vector<1x512xf32>
    %20 = math.floor %11 : vector<1x512xf32>
    %21 = arith.subf %11, %20 : vector<1x512xf32>
    %22 = math.floor %16 : vector<1x512xf32>
    %23 = arith.subf %16, %22 : vector<1x512xf32>
    %cst_9 = arith.constant -2.000000e+00 : f32
    %cst_10 = arith.constant 8.000000e+00 : f32
    %24 = vector.broadcast %cst_9 : f32 to vector<1x512xf32>
    %25 = arith.maximumf %24, %18 : vector<1x512xf32>
    %26 = vector.broadcast %cst_10 : f32 to vector<1x512xf32>
    %27 = arith.minimumf %26, %25 : vector<1x512xf32>
    %28 = arith.fptosi %27 : vector<1x512xf32> to vector<1x512xi32>
    %c2_i32 = arith.constant 2 : i32
    %29 = vector.broadcast %c2_i32 : i32 to vector<1x512xi32>
    %30 = arith.addi %28, %29 : vector<1x512xi32>
    %cst_11 = arith.constant -2.000000e+00 : f32
    %cst_12 = arith.constant 8.000000e+00 : f32
    %31 = vector.broadcast %cst_11 : f32 to vector<1x512xf32>
    %32 = arith.maximumf %31, %20 : vector<1x512xf32>
    %33 = vector.broadcast %cst_12 : f32 to vector<1x512xf32>
    %34 = arith.minimumf %33, %32 : vector<1x512xf32>
    %35 = arith.fptosi %34 : vector<1x512xf32> to vector<1x512xi32>
    %c2_i32_13 = arith.constant 2 : i32
    %36 = vector.broadcast %c2_i32_13 : i32 to vector<1x512xi32>
    %37 = arith.addi %35, %36 : vector<1x512xi32>
    %cst_14 = arith.constant -2.000000e+00 : f32
    %cst_15 = arith.constant 4.000000e+00 : f32
    %38 = vector.broadcast %cst_14 : f32 to vector<1x512xf32>
    %39 = arith.maximumf %38, %22 : vector<1x512xf32>
    %40 = vector.broadcast %cst_15 : f32 to vector<1x512xf32>
    %41 = arith.minimumf %40, %39 : vector<1x512xf32>
    %42 = arith.fptosi %41 : vector<1x512xf32> to vector<1x512xi32>
    %c2_i32_16 = arith.constant 2 : i32
    %43 = vector.broadcast %c2_i32_16 : i32 to vector<1x512xi32>
    %44 = arith.addi %42, %43 : vector<1x512xi32>
    %c12_i32 = arith.constant 12 : i32
    %45 = vector.broadcast %c12_i32 : i32 to vector<1x512xi32>
    %46 = arith.muli %37, %45 : vector<1x512xi32>
    %47 = arith.addi %46, %30 : vector<1x512xi32>
    %cst_17 = arith.constant 1.000000e+00 : f32
    %48 = vector.broadcast %cst_17 : f32 to vector<1x512xf32>
    %49 = arith.subf %48, %19 : vector<1x512xf32>
    %cst_18 = arith.constant 1.000000e+00 : f32
    %50 = vector.broadcast %cst_18 : f32 to vector<1x512xf32>
    %51 = arith.subf %50, %21 : vector<1x512xf32>
    %52 = arith.mulf %49, %51 : vector<1x512xf32>
    %53 = arith.mulf %52, %17 : vector<1x512xf32>
    %cst_19 = arith.constant 1.000000e+00 : f32
    %54 = vector.broadcast %cst_19 : f32 to vector<1x512xf32>
    %55 = arith.subf %54, %21 : vector<1x512xf32>
    %56 = arith.mulf %19, %55 : vector<1x512xf32>
    %57 = arith.mulf %56, %17 : vector<1x512xf32>
    %cst_20 = arith.constant 1.000000e+00 : f32
    %58 = vector.broadcast %cst_20 : f32 to vector<1x512xf32>
    %59 = arith.subf %58, %19 : vector<1x512xf32>
    %60 = arith.mulf %59, %21 : vector<1x512xf32>
    %61 = arith.mulf %60, %17 : vector<1x512xf32>
    %62 = arith.mulf %19, %21 : vector<1x512xf32>
    %63 = arith.mulf %62, %17 : vector<1x512xf32>
    %64 = tpu.iota {dimensions = array<i32: 0>} : vector<144x512xi32>
    %65 = vector.broadcast %47 : vector<1x512xi32> to vector<144x512xi32>
    %66 = arith.subi %64, %65 : vector<144x512xi32>
    %c0_i32 = arith.constant 0 : i32
    %67 = vector.broadcast %c0_i32 : i32 to vector<144x512xi32>
    %68 = arith.cmpi eq, %66, %67 : vector<144x512xi32>
    %c1_i32 = arith.constant 1 : i32
    %69 = vector.broadcast %c1_i32 : i32 to vector<144x512xi32>
    %70 = arith.cmpi eq, %66, %69 : vector<144x512xi32>
    %c12_i32_21 = arith.constant 12 : i32
    %71 = vector.broadcast %c12_i32_21 : i32 to vector<144x512xi32>
    %72 = arith.cmpi eq, %66, %71 : vector<144x512xi32>
    %c13_i32 = arith.constant 13 : i32
    %73 = vector.broadcast %c13_i32 : i32 to vector<144x512xi32>
    %74 = arith.cmpi eq, %66, %73 : vector<144x512xi32>
    %cst_22 = arith.constant 0.000000e+00 : f32
    %75 = vector.shape_cast %63 : vector<1x512xf32> to vector<1x512xf32>
    %76 = vector.broadcast %75 : vector<1x512xf32> to vector<144x512xf32>
    %77 = vector.broadcast %cst_22 : f32 to vector<144x512xf32>
    %78 = arith.select %74, %76, %77 : vector<144x512xi1>, vector<144x512xf32>
    %79 = vector.shape_cast %61 : vector<1x512xf32> to vector<1x512xf32>
    %80 = vector.broadcast %79 : vector<1x512xf32> to vector<144x512xf32>
    %81 = arith.select %72, %80, %78 : vector<144x512xi1>, vector<144x512xf32>
    %82 = vector.shape_cast %57 : vector<1x512xf32> to vector<1x512xf32>
    %83 = vector.broadcast %82 : vector<1x512xf32> to vector<144x512xf32>
    %84 = arith.select %70, %83, %81 : vector<144x512xi1>, vector<144x512xf32>
    %85 = vector.shape_cast %53 : vector<1x512xf32> to vector<1x512xf32>
    %86 = vector.broadcast %85 : vector<1x512xf32> to vector<144x512xf32>
    %87 = arith.select %68, %86, %84 : vector<144x512xi1>, vector<144x512xf32>
    %c0_23 = arith.constant 0 : index
    %c0_24 = arith.constant 0 : index
    %c0_25 = arith.constant 0 : index
    %c0_26 = arith.constant 0 : index
    %88 = vector.load %arg4[%c0_23, %c0_24, %c0_25, %c0_26] : memref<1x1x64x144xbf16, #tpu.memory_space<vmem>>, vector<1x1x64x144xbf16>
    %89 = vector.shape_cast %88 : vector<1x1x64x144xbf16> to vector<64x144xbf16>
    %90 = arith.truncf %87 : vector<144x512xf32> to vector<144x512xbf16>
    %cst_27 = arith.constant dense<0.000000e+00> : vector<64x512xf32>
    %91 = tpu.matmul %89, %90, %cst_27 {dimension_numbers = #tpu.dot_dimension_numbers<[1], [0], [0], [1], [0, 0, 1, 1], [], []>} : vector<64x144xbf16>, vector<144x512xbf16>, vector<64x512xf32> -> vector<64x512xf32>
    %92 = tpu.iota {dimensions = array<i32: 0>} : vector<8x512xi32>
    %93 = vector.broadcast %44 : vector<1x512xi32> to vector<8x512xi32>
    %94 = arith.cmpi eq, %92, %93 : vector<8x512xi32>
    %cst_28 = arith.constant 1.000000e+00 : f32
    %95 = vector.broadcast %cst_28 : f32 to vector<1x512xf32>
    %96 = arith.subf %95, %23 : vector<1x512xf32>
    %cst_29 = arith.constant 0.000000e+00 : f32
    %97 = vector.shape_cast %96 : vector<1x512xf32> to vector<1x512xf32>
    %98 = vector.broadcast %97 : vector<1x512xf32> to vector<8x512xf32>
    %99 = vector.broadcast %cst_29 : f32 to vector<8x512xf32>
    %100 = arith.select %94, %98, %99 : vector<8x512xi1>, vector<8x512xf32>
    %c1_i32_30 = arith.constant 1 : i32
    %101 = vector.broadcast %c1_i32_30 : i32 to vector<1x512xi32>
    %102 = arith.addi %44, %101 : vector<1x512xi32>
    %103 = vector.broadcast %102 : vector<1x512xi32> to vector<8x512xi32>
    %104 = arith.cmpi eq, %92, %103 : vector<8x512xi32>
    %cst_31 = arith.constant 0.000000e+00 : f32
    %105 = vector.shape_cast %23 : vector<1x512xf32> to vector<1x512xf32>
    %106 = vector.broadcast %105 : vector<1x512xf32> to vector<8x512xf32>
    %107 = vector.broadcast %cst_31 : f32 to vector<8x512xf32>
    %108 = arith.select %104, %106, %107 : vector<8x512xi1>, vector<8x512xf32>
    %109 = arith.addf %100, %108 : vector<8x512xf32>
    %110 = vector.shape_cast %91 : vector<64x512xf32> to vector<8x8x512xf32>
    %111 = vector.shape_cast %109 : vector<8x512xf32> to vector<8x1x512xf32>
    %112 = vector.broadcast %111 : vector<8x1x512xf32> to vector<8x8x512xf32>
    %113 = arith.mulf %110, %112 : vector<8x8x512xf32>
    %cst_32 = arith.constant dense<0.000000e+00> : vector<8x512xf32>
    %114 = vector.multi_reduction <add>, %113, %cst_32 [0] : vector<8x8x512xf32> to vector<8x512xf32>
    %115 = vector.extract_strided_slice %114 {offsets = [0, 0], sizes = [8, 128], strides = [1, 1]} : vector<8x512xf32> to vector<8x128xf32>
    %116 = vector.extract_strided_slice %114 {offsets = [0, 128], sizes = [8, 128], strides = [1, 1]} : vector<8x512xf32> to vector<8x128xf32>
    %117 = arith.addf %115, %116 : vector<8x128xf32>
    %118 = vector.extract_strided_slice %114 {offsets = [0, 256], sizes = [8, 128], strides = [1, 1]} : vector<8x512xf32> to vector<8x128xf32>
    %119 = arith.addf %117, %118 : vector<8x128xf32>
    %120 = vector.extract_strided_slice %114 {offsets = [0, 384], sizes = [8, 128], strides = [1, 1]} : vector<8x512xf32> to vector<8x128xf32>
    %121 = arith.addf %119, %120 : vector<8x128xf32>
    %c0_33 = arith.constant 0 : index
    %c0_34 = arith.constant 0 : index
    %c0_35 = arith.constant 0 : index
    %c0_36 = arith.constant 0 : index
    %122 = vector.load %arg5[%c0_33, %c0_34, %c0_35, %c0_36] : memref<1x1x8x128xf32, #tpu.memory_space<vmem>>, vector<1x1x8x128xf32>
    %123 = vector.shape_cast %122 : vector<1x1x8x128xf32> to vector<8x128xf32>
    %124 = vector.shape_cast %121 : vector<8x128xf32> to vector<1x1x8x128xf32>
    tpu.vector_store %arg5[%c0_33, %c0_34, %c0_35, %c0_36], %124 {strides = array<i32>} : memref<1x1x8x128xf32, #tpu.memory_space<vmem>>, vector<1x1x8x128xf32>,
    return
  }
  func.func @transform_0(%arg0: i32, %arg1: i32, %arg2: i32) -> (i32, i32, i32, i32, i32) {
    %c0_i32 = arith.constant 0 : i32
    %c0_i32_0 = arith.constant 0 : i32
    %c0_i32_1 = arith.constant 0 : i32
    return %arg0, %arg1, %arg2, %c0_i32, %c0_i32_0 : i32, i32, i32, i32, i32
  }
  func.func @transform_1(%arg0: i32, %arg1: i32, %arg2: i32) -> (i32, i32, i32, i32) {
    %c0_i32 = arith.constant 0 : i32
    %c0_i32_0 = arith.constant 0 : i32
    %c0_i32_1 = arith.constant 0 : i32
    return %arg0, %arg1, %c0_i32, %c0_i32_0 : i32, i32, i32, i32
  }
  func.func @transform_2(%arg0: i32, %arg1: i32, %arg2: i32) -> (i32, i32, i32, i32) {
    %c0_i32 = arith.constant 0 : i32
    %c0_i32_0 = arith.constant 0 : i32
    return %arg0, %arg1, %c0_i32, %arg2 : i32, i32, i32, i32
  }
}

</mosaic_0001>

<llo_original>
// kernel: tpu_custom_call.1
$region0: #{tpu_custom_call.1}
  #allocation0 [shape = 'u32[]', space=smem, size = 0x4, offset = 0x4, fixed_abs, tag = 'smem constant byte address 0x4 - core index']
  #allocation1 [shape = 'u32[144,128]{1,0:T(1,128)}', space=vmem, size = 0x12000, scoped, tag = 'internal scratch']
  %s0 = inlined_call_operand.hbm [shape: f32[2,4,1,4,512], index: 0, kind: input, shape index: {}]
  %s1 = inlined_call_operand.hbm [shape: bf16[2,4,64,144], index: 1, kind: input, shape index: {}]
  %s2 = inlined_call_operand.hbm [shape: f32[2,4,8,128], index: 2, kind: output, shape index: {}]
  %s3 = sld [smem:[#allocation0]]
  $region49: #{tpu_custom_call.1} parent=0
    _
  %s5 = ssub.s32 1, %s3
  %s6 = scalar_select 0, %s5, %s3
  $region1: #{tpu_custom_call.1} parent=0
    #allocation2 [shape = 'u8[16384]{0}', space=vmem, size = 0x4000, scoped, tag = 'input window, operand 0']
    #allocation3 [shape = 's32[2]{0}', space=sflag, size = 0x8, scoped, tag = 'scoped memory for tpu_custom_call.1']
    #allocation4 [shape = 's32[2]{0}', space=sflag, size = 0x8, scoped, tag = 'scoped memory for tpu_custom_call.1']
    #allocation5 [shape = 'u8[65536]{0}', space=vmem, size = 0x10000, scoped, tag = 'input window, operand 1']
    #allocation6 [shape = 's32[2]{0}', space=sflag, size = 0x8, scoped, tag = 'scoped memory for tpu_custom_call.1']
    #allocation7 [shape = 'u8[8192]{0}', space=vmem, size = 0x2000, scoped, tag = 'output window, operand 0']
    %7 = vsyncpa [#allocation3], 0
    %s8 = scalar_lea.sflag [#allocation3], 1
    %9 = vsyncpa %s8, 0
    %10 = vsyncpa [#allocation6], 0
    %s11 = scalar_lea.sflag [#allocation6], 1
    %12 = vsyncpa %s11, 0
    %13 = vsyncpa [#allocation4], 0
    %s14 = scalar_lea.sflag [#allocation4], 1
    %15 = vsyncpa %s14, 0
    loop: start=0, step=1, limit=10
    $region2: #{tpu_custom_call.1} parent=1 // loop_pre_header
      _
    $region3: #{tpu_custom_call.1} parent=1 // loop_header
      %s17 = sphi 0, %s21
      %p18 = scmp.ge.s32.totalorder %s17, 10
      %s24 = sphi 0, %s43
      %s25 = sphi 0, %s39
      %s26 = sphi 0, %s35
      %s27 = sphi 0, %s24
      %s28 = sphi 0, %s25
      %s29 = sphi 0, %s26
      %s30 = sphi 0, %s27
      %s31 = sphi 0, %s28
      %s32 = sphi 0, %s29
      %s50 = sphi 0, %s52
      %s53 = sphi 0, %s50
      %s54 = sphi 0, %s53
      %s70 = sphi 0, %s54
      %s78 = sphi 0, %s80
      %s81 = sphi 0, %s78
      %s82 = sphi 0, %s81
      %s98 = sphi 0, %s82
      %s108 = sphi 0, %s110
      %s111 = sphi 0, %s108
      %s112 = sphi 0, %s111
      %s128 = sphi 0, %s112
    $region4: #{tpu_custom_call.1} parent=1 // loop_header_branch
      %20 = sbr.rel (%p18) target = $region8
    $region5: #{tpu_custom_call.1} parent=1 // loop_body
      %s22 = ssub.s32 %s17, 1
      %s23 = ssub.s32 %s17, 2
      %s33 = sadd.s32 1, %s26
      %p34 = scmp.ge.s32.totalorder %s33, 1
      %s35 = scalar_select %p34, 0, %s33
      %s36 = sadd.s32 1, %s25
      %s37 = scalar_select %p34, %s36, %s25
      %p38 = scmp.ge.s32.totalorder %s37, 4
      %s39 = scalar_select %p38, 0, %s37
      %s40 = sadd.s32 1, %s24
      %s41 = scalar_select %p38, %s40, %s24
      %p42 = scmp.ge.s32.totalorder %s41, 2
      %s43 = scalar_select %p42, 0, %s41
      %s44 = ssub.s32 %s24, %s43
      %s45 = ssub.s32 %s25, %s39
      %s46 = sor.u32 %s44, %s45
      %s47 = ssub.s32 %s26, %s35
      %s48 = sor.u32 %s46, %s47
      %p49 = scmp.eq.s32.totalorder %s48, 0
      %s51 = sadd.s32 %s50, 1
      %s52 = scalar_select %p49, %s50, %s51
      %p55 = pneg %p49
      %p56 = scmp.eq.s32.totalorder %s17, 7
      %p57 = por %p55, %p56
      %p58 = scmp.ne.s32.totalorder %s50, %s53
      %p59 = scmp.eq.s32.totalorder %s17, 0
      %p60 = por %p58, %p59
      %p61 = scmp.ne.s32.totalorder %s50, %s53
      %p62 = scmp.eq.s32.totalorder %s22, 7
      %p63 = por %p61, %p62
      %p64 = scmp.ne.s32.totalorder %s53, %s54
      %p65 = scmp.eq.s32.totalorder %s22, 0
      %p66 = por %p64, %p65
      %p67 = scmp.ne.s32.totalorder %s53, %s54
      %p68 = scmp.eq.s32.totalorder %s23, 7
      %p69 = por %p67, %p68
      %p71 = scmp.ne.s32.totalorder %s54, %s70
      %p72 = scmp.eq.s32.totalorder %s23, 0
      %p73 = por %p71, %p72
      %s74 = ssub.s32 %s24, %s43
      %s75 = ssub.s32 %s25, %s39
      %s76 = sor.u32 %s74, %s75
      %p77 = scmp.eq.s32.totalorder %s76, 0
      %s79 = sadd.s32 %s78, 1
      %s80 = scalar_select %p77, %s78, %s79
      %p83 = pneg %p77
      %p84 = scmp.eq.s32.totalorder %s17, 7
      %p85 = por %p83, %p84
      %p86 = scmp.ne.s32.totalorder %s78, %s81
      %p87 = scmp.eq.s32.totalorder %s17, 0
      %p88 = por %p86, %p87
      %p89 = scmp.ne.s32.totalorder %s78, %s81
      %p90 = scmp.eq.s32.totalorder %s22, 7
      %p91 = por %p89, %p90
      %p92 = scmp.ne.s32.totalorder %s81, %s82
      %p93 = scmp.eq.s32.totalorder %s22, 0
      %p94 = por %p92, %p93
      %p95 = scmp.ne.s32.totalorder %s81, %s82
      %p96 = scmp.eq.s32.totalorder %s23, 7
      %p97 = por %p95, %p96
      %p99 = scmp.ne.s32.totalorder %s82, %s98
      %p100 = scmp.eq.s32.totalorder %s23, 0
      %p101 = por %p99, %p100
      %s102 = ssub.s32 %s24, %s43
      %s103 = ssub.s32 %s25, %s39
      %s104 = sor.u32 %s102, %s103
      %s105 = ssub.s32 %s26, %s35
      %s106 = sor.u32 %s104, %s105
      %p107 = scmp.eq.s32.totalorder %s106, 0
      %s109 = sadd.s32 %s108, 1
      %s110 = scalar_select %p107, %s108, %s109
      %p113 = pneg %p107
      %p114 = scmp.eq.s32.totalorder %s17, 7
      %p115 = por %p113, %p114
      %p116 = scmp.ne.s32.totalorder %s108, %s111
      %p117 = scmp.eq.s32.totalorder %s17, 0
      %p118 = por %p116, %p117
      %p119 = scmp.ne.s32.totalorder %s108, %s111
      %p120 = scmp.eq.s32.totalorder %s22, 7
      %p121 = por %p119, %p120
      %p122 = scmp.ne.s32.totalorder %s111, %s112
      %p123 = scmp.eq.s32.totalorder %s22, 0
      %p124 = por %p122, %p123
      %p125 = scmp.ne.s32.totalorder %s111, %s112
      %p126 = scmp.eq.s32.totalorder %s23, 7
      %p127 = por %p125, %p126
      %p129 = scmp.ne.s32.totalorder %s112, %s128
      %p130 = scmp.eq.s32.totalorder %s23, 0
      %p131 = por %p129, %p130
      %p132 = scmp.le.s32.totalorder 1, %s17
      %p133 = scmp.lt.s32.totalorder %s17, 9
      %p134 = pnand %p132, %p133
      %p135 = pneg %p134
      // Predicated region
      $region9: #{tpu_custom_call.1} parent=5 // pred_check
        _
      $region10: #{tpu_custom_call.1} parent=5 // pred_check_branch
        %137 = sbr.rel (%p134) target = $region12
      $region11: #{tpu_custom_call.1} parent=5 // pred_region
        %s138 = ssub.s32 %s17, 1
      $region12: #{tpu_custom_call.1} parent=5 // pred_fallthru
        _
      %p139 = scmp.lt.s32.totalorder %s17, 8
      // Predicated region
      $region13: #{tpu_custom_call.1} parent=5 // pred_check
        %p140 = pneg %p139
      $region14: #{tpu_custom_call.1} parent=5 // pred_check_branch
        %142 = sbr.rel (%p140) target = $region16
      $region15: #{tpu_custom_call.1} parent=5 // pred_region
        // Predicated region
        $region17: #{tpu_custom_call.1} parent=15 // pred_check
          %p143 = pneg %p60
        $region18: #{tpu_custom_call.1} parent=15 // pred_check_branch
          %145 = sbr.rel (%p143) target = $region20
        $region19: #{tpu_custom_call.1} parent=15 // pred_region
          %s146 = sand.u32 %s50, 1
          %s147 = scalar_lea.sflag [#allocation3], %s146
          %s148 = sand.u32 %s50, 1
          %s149 = smul.addr %s148, 16
          %s150 = scalar_lea.vmem [#allocation2], %s149
          %s152 = ssub.s32 256, 256
          %153 = vsyncadd %s147, %s152
          %s154 = smul.addr %s26, 4
          %s155 = smul.addr %s25, 4
          %s156 = sadd.s32 %s154, %s155
          %s157 = smul.addr %s24, 16
          %s158 = sadd.s32 %s156, %s157
          %s159 = smul.addr %s158, 64
          %s160 = scalar_lea.hbm %s0, %s159
          %s162 = sshll.u32 %s150, 4
          %s163 = int_to_ptr.vmem [resolvable:$true] %s162
          %165 = dma.hbm_to_vmem [thread:$0]  %s160, 256, %s163, %s147
        $region20: #{tpu_custom_call.1} parent=15 // pred_fallthru
          _
        // Predicated region
        $region21: #{tpu_custom_call.1} parent=15 // pred_check
          %p166 = pneg %p88
        $region22: #{tpu_custom_call.1} parent=15 // pred_check_branch
          %168 = sbr.rel (%p166) target = $region24
        $region23: #{tpu_custom_call.1} parent=15 // pred_region
          %s169 = sand.u32 %s78, 1
          %s170 = scalar_lea.sflag [#allocation6], %s169
          %s171 = sand.u32 %s78, 1
          %s172 = smul.addr %s171, 64
          %s173 = scalar_lea.vmem [#allocation5], %s172
          %s175 = ssub.s32 1024, 1024
          %176 = vsyncadd %s170, %s175
          %s177 = smul.addr %s25, 16
          %s178 = smul.addr %s24, 64
          %s179 = sadd.s32 %s177, %s178
          %s180 = smul.addr %s179, 64
          %s181 = scalar_lea.hbm %s1, %s180
          %s182 = sshll.u32 %s173, 4
          %s183 = int_to_ptr.vmem [resolvable:$true] %s182
          %188 = dma.hbm_to_vmem [thread:$0]  %s181, 1024, %s183, %s170, 128, 128, 8
        $region24: #{tpu_custom_call.1} parent=15 // pred_fallthru
          _
      $region16: #{tpu_custom_call.1} parent=5 // pred_fallthru
        _
      %p189 = scmp.le.s32.totalorder 1, %s17
      %p190 = scmp.lt.s32.totalorder %s17, 9
      %p191 = pnand %p189, %p190
      %p192 = pneg %p191
      // Predicated region
      $region25: #{tpu_custom_call.1} parent=5 // pred_check
        _
      $region26: #{tpu_custom_call.1} parent=5 // pred_check_branch
        %194 = sbr.rel (%p191) target = $region28
      $region27: #{tpu_custom_call.1} parent=5 // pred_region
        %s195 = ssub.s32 %s17, 1
        %s196 = sand.u32 %s53, 1
        %s197 = scalar_lea.sflag [#allocation3], %s196
        %s198 = sand.u32 %s53, 1
        %s199 = smul.addr %s198, 16
        %s200 = scalar_lea.vmem [#allocation2], %s199
        // Predicated region
        $region29: #{tpu_custom_call.1} parent=27 // pred_check
          %p201 = pneg %p66
        $region30: #{tpu_custom_call.1} parent=27 // pred_check_branch
          %203 = sbr.rel (%p201) target = $region32
        $region31: #{tpu_custom_call.1} parent=27 // pred_region
          %204 = dma.done %s197, 256
        $region32: #{tpu_custom_call.1} parent=27 // pred_fallthru
          _
        %s205 = sand.u32 %s81, 1
        %s206 = scalar_lea.sflag [#allocation6], %s205
        %s207 = sand.u32 %s81, 1
        %s208 = smul.addr %s207, 64
        %s209 = scalar_lea.vmem [#allocation5], %s208
        // Predicated region
        $region33: #{tpu_custom_call.1} parent=27 // pred_check
          %p210 = pneg %p94
        $region34: #{tpu_custom_call.1} parent=27 // pred_check_branch
          %212 = sbr.rel (%p210) target = $region36
        $region35: #{tpu_custom_call.1} parent=27 // pred_region
          %213 = dma.done %s206, 1024
        $region36: #{tpu_custom_call.1} parent=27 // pred_fallthru
          _
        %s214 = sand.u32 %s53, 1
        %s215 = scalar_lea.sflag [#allocation3], %s214
        %s216 = sand.u32 %s53, 1
        %s217 = smul.addr %s216, 16
        %s218 = scalar_lea.vmem [#allocation2], %s217
        %p219 = pneg %p66
        %p220 = pneg %p63
        %s221 = sand.u32 %s81, 1
        %s222 = scalar_lea.sflag [#allocation6], %s221
        %s223 = sand.u32 %s81, 1
        %s224 = smul.addr %s223, 64
        %s225 = scalar_lea.vmem [#allocation5], %s224
        %p226 = pneg %p94
        %p227 = pneg %p91
        %p228 = pneg %p124
        %p229 = pneg %p121
        %s230 = sand.u32 %s111, 1
        %s231 = scalar_lea.sflag [#allocation4], %s230
        %s232 = sand.u32 %s111, 1
        %s233 = smul.addr %s232, 8
        %s234 = scalar_lea.vmem [#allocation7], %s233
        %v236 = vld [vmem:[%s200] sm:$0xff]
        %v237 = vld [vmem:[%s200 + $0x8] sm:$0xff]
        %v238 = vmul.f32 %v236, 8.0
        %v239 = vmul.f32 %v237, 8.0
        %v240 = vsub.f32 %v238, 0.5
        %v241 = vsub.f32 %v239, 0.5
        %v242 = vmul.f32 %v236, 4.0
        %v243 = vmul.f32 %v237, 4.0
        %v244 = vsub.f32 %v242, 0.5
        %v245 = vsub.f32 %v243, 0.5
        %v246 = vfloor.f32 %v240
        %v247 = vfloor.f32 %v241
        %v248 = vsub.f32 %v240, %v246
        %v249 = vsub.f32 %v241, %v247
        %v250 = vfloor.f32 %v244
        %v251 = vfloor.f32 %v245
        %v252 = vsub.f32 %v244, %v250
        %v253 = vsub.f32 %v245, %v251
        %v254 = vmax.f32 %v246, -2.0
        %v255 = vmax.f32 %v247, -2.0
        %v256 = vmin.f32 %v254, 8.0
        %v257 = vmin.f32 %v255, 8.0
        %v258 = vcvt.f32.s32.to.zero.pseudo %v256
        %v259 = vcvt.f32.s32.to.zero.pseudo %v257
        %v260 = vadd.s32 %v258, 2
        %v261 = vadd.s32 %v259, 2
        %v262 = vmax.f32 %v250, -2.0
        %v263 = vmax.f32 %v251, -2.0
        %v264 = vmin.f32 %v262, 4.0
        %v265 = vmin.f32 %v263, 4.0
        %v266 = vcvt.f32.s32.to.zero.pseudo %v264
        %v267 = vcvt.f32.s32.to.zero.pseudo %v265
        %v268 = vadd.s32 %v266, 2
        %v269 = vadd.s32 %v267, 2
        %v270 = vmul.u32 %v260, 12
        %v271 = vmul.u32 %v261, 12
        %v272 = vrot.slane %v260, 7
        %v273 = vrot.slane %v261, 7
        %v274 = vadd.s32 %v270, %v272
        %v275 = vadd.s32 %v271, %v273
        %v276 = vsub.f32 1.0, %v248
        %v277 = vsub.f32 1.0, %v249
        %v280 = vrot.slane %v276, 5
        %v281 = vrot.slane %v280, 4
        %v282 = vrot.slane %v277, 5
        %v283 = vrot.slane %v282, 4
        %v286 = vmul.f32 %v276, %v281
        %v287 = vmul.f32 %v277, %v283
        %v290 = vrot.slane %v236, 7
        %v291 = vrot.slane %v290, 4
        %v292 = vrot.slane %v237, 7
        %v293 = vrot.slane %v292, 4
        %v296 = vmul.f32 %v286, %v291
        %v297 = vmul.f32 %v287, %v293
        %v298 = vmul.f32 %v248, %v281
        %v299 = vmul.f32 %v249, %v283
        %v300 = vmul.f32 %v298, %v291
        %v301 = vmul.f32 %v299, %v293
        %v304 = vrot.slane %v248, 5
        %v305 = vrot.slane %v304, 4
        %v306 = vrot.slane %v249, 5
        %v307 = vrot.slane %v306, 4
        %v310 = vmul.f32 %v276, %v305
        %v311 = vmul.f32 %v277, %v307
        %v312 = vmul.f32 %v310, %v291
        %v313 = vmul.f32 %v311, %v293
        %v314 = vmul.f32 %v248, %v305
        %v315 = vmul.f32 %v249, %v307
        %v316 = vmul.f32 %v314, %v291
        %v317 = vmul.f32 %v315, %v293
        %v318 = vlaneseq
        %v319 = vshrl.u32 %v318, 7
        %v320 = vadd.s32 %v319, 8
        %v321 = vadd.s32 %v319, 16
        %v322 = vadd.s32 %v319, 24
        %v323 = vadd.s32 %v319, 32
        %v324 = vadd.s32 %v319, 40
        %v325 = vadd.s32 %v319, 48
        %v326 = vadd.s32 %v319, 56
        %v327 = vadd.s32 %v319, 64
        %v328 = vadd.s32 %v319, 72
        %v329 = vadd.s32 %v319, 80
        %v330 = vadd.s32 %v319, 88
        %v331 = vadd.s32 %v319, 96
        %v332 = vadd.s32 %v319, 104
        %v333 = vadd.s32 %v319, 112
        %v334 = vadd.s32 %v319, 120
        %v335 = vadd.s32 %v319, 128
        %v336 = vadd.s32 %v319, 136
        %v337 = vlaneseq
        %v338 = vshrl.u32 %v337, 7
        %v339 = vsub.s32 1, %v338
        %v340 = vrot.slane %v274, %v339
        %v341 = vlaneseq
        %v342 = vshrl.u32 %v341, 7
        %v343 = vsub.s32 5, %v342
        %v344 = vrot.slane %v274, %v343
        %v345 = vlaneseq
        %v346 = vshrl.u32 %v345, 7
        %v347 = vsub.s32 1, %v346
        %v348 = vrot.slane %v275, %v347
        %v349 = vlaneseq
        %v350 = vshrl.u32 %v349, 7
        %v351 = vsub.s32 5, %v350
        %v352 = vrot.slane %v275, %v351
        %v353 = vlaneseq
        %v354 = vshrl.u32 %v353, 7
        %v355 = vsub.s32 1, %v354
        %v356 = vrot.slane %v340, %v355
        %v357 = vlaneseq
        %v358 = vshrl.u32 %v357, 7
        %v359 = vsub.s32 1, %v358
        %v360 = vrot.slane %v344, %v359
        %v361 = vlaneseq
        %v362 = vshrl.u32 %v361, 7
        %v363 = vsub.s32 1, %v362
        %v364 = vrot.slane %v348, %v363
        %v365 = vlaneseq
        %v366 = vshrl.u32 %v365, 7
        %v367 = vsub.s32 1, %v366
        %v368 = vrot.slane %v352, %v367
        %v369 = vsub.s32 %v319, %v356
        %v370 = vsub.s32 %v319, %v360
        %v371 = vsub.s32 %v319, %v364
        %v372 = vsub.s32 %v319, %v368
        %v373 = vsub.s32 %v320, %v356
        %v374 = vsub.s32 %v320, %v360
        %v375 = vsub.s32 %v320, %v364
        %v376 = vsub.s32 %v320, %v368
        %v377 = vsub.s32 %v321, %v356
        %v378 = vsub.s32 %v321, %v360
        %v379 = vsub.s32 %v321, %v364
        %v380 = vsub.s32 %v321, %v368
        %v381 = vsub.s32 %v322, %v356
        %v382 = vsub.s32 %v322, %v360
        %v383 = vsub.s32 %v322, %v364
        %v384 = vsub.s32 %v322, %v368
        %v385 = vsub.s32 %v323, %v356
        %v386 = vsub.s32 %v323, %v360
        %v387 = vsub.s32 %v323, %v364
        %v388 = vsub.s32 %v323, %v368
        %v389 = vsub.s32 %v324, %v356
        %v390 = vsub.s32 %v324, %v360
        %v391 = vsub.s32 %v324, %v364
        %v392 = vsub.s32 %v324, %v368
        %v393 = vsub.s32 %v325, %v356
        %v394 = vsub.s32 %v325, %v360
        %v395 = vsub.s32 %v325, %v364
        %v396 = vsub.s32 %v325, %v368
        %v397 = vsub.s32 %v326, %v356
        %v398 = vsub.s32 %v326, %v360
        %v399 = vsub.s32 %v326, %v364
        %v400 = vsub.s32 %v326, %v368
        %v401 = vsub.s32 %v327, %v356
        %v402 = vsub.s32 %v327, %v360
        %v403 = vsub.s32 %v327, %v364
        %v404 = vsub.s32 %v327, %v368
        %v405 = vsub.s32 %v328, %v356
        %v406 = vsub.s32 %v328, %v360
        %v407 = vsub.s32 %v328, %v364
        %v408 = vsub.s32 %v328, %v368
        %v409 = vsub.s32 %v329, %v356
        %v410 = vsub.s32 %v329, %v360
        %v411 = vsub.s32 %v329, %v364
        %v412 = vsub.s32 %v329, %v368
        %v413 = vsub.s32 %v330, %v356
        %v414 = vsub.s32 %v330, %v360
        %v415 = vsub.s32 %v330, %v364
        %v416 = vsub.s32 %v330, %v368
        %v417 = vsub.s32 %v331, %v356
        %v418 = vsub.s32 %v331, %v360
        %v419 = vsub.s32 %v331, %v364
        %v420 = vsub.s32 %v331, %v368
        %v421 = vsub.s32 %v332, %v356
        %v422 = vsub.s32 %v332, %v360
        %v423 = vsub.s32 %v332, %v364
        %v424 = vsub.s32 %v332, %v368
        %v425 = vsub.s32 %v333, %v356
        %v426 = vsub.s32 %v333, %v360
        %v427 = vsub.s32 %v333, %v364
        %v428 = vsub.s32 %v333, %v368
        %v429 = vsub.s32 %v334, %v356
        %v430 = vsub.s32 %v334, %v360
        %v431 = vsub.s32 %v334, %v364
        %v432 = vsub.s32 %v334, %v368
        %v433 = vsub.s32 %v335, %v356
        %v434 = vsub.s32 %v335, %v360
        %v435 = vsub.s32 %v335, %v364
        %v436 = vsub.s32 %v335, %v368
        %v437 = vsub.s32 %v336, %v356
        %v438 = vsub.s32 %v336, %v360
        %v439 = vsub.s32 %v336, %v364
        %v440 = vsub.s32 %v336, %v368
        %vm441 = vcmp.eq.s32.totalorder %v369, 0
        %vm442 = vcmp.eq.s32.totalorder %v370, 0
        %vm443 = vcmp.eq.s32.totalorder %v371, 0
        %vm444 = vcmp.eq.s32.totalorder %v372, 0
        %vm445 = vcmp.eq.s32.totalorder %v373, 0
        %vm446 = vcmp.eq.s32.totalorder %v374, 0
        %vm447 = vcmp.eq.s32.totalorder %v375, 0
        %vm448 = vcmp.eq.s32.totalorder %v376, 0
        %vm449 = vcmp.eq.s32.totalorder %v377, 0
        %vm450 = vcmp.eq.s32.totalorder %v378, 0
        %vm451 = vcmp.eq.s32.totalorder %v379, 0
        %vm452 = vcmp.eq.s32.totalorder %v380, 0
        %vm453 = vcmp.eq.s32.totalorder %v381, 0
        %vm454 = vcmp.eq.s32.totalorder %v382, 0
        %vm455 = vcmp.eq.s32.totalorder %v383, 0
        %vm456 = vcmp.eq.s32.totalorder %v384, 0
        %vm457 = vcmp.eq.s32.totalorder %v385, 0
        %vm458 = vcmp.eq.s32.totalorder %v386, 0
        %vm459 = vcmp.eq.s32.totalorder %v387, 0
        %vm460 = vcmp.eq.s32.totalorder %v388, 0
        %vm461 = vcmp.eq.s32.totalorder %v389, 0
        %vm462 = vcmp.eq.s32.totalorder %v390, 0
        %vm463 = vcmp.eq.s32.totalorder %v391, 0
        %vm464 = vcmp.eq.s32.totalorder %v392, 0
        %vm465 = vcmp.eq.s32.totalorder %v393, 0
        %vm466 = vcmp.eq.s32.totalorder %v394, 0
        %vm467 = vcmp.eq.s32.totalorder %v395, 0
        %vm468 = vcmp.eq.s32.totalorder %v396, 0
        %vm469 = vcmp.eq.s32.totalorder %v397, 0
        %vm470 = vcmp.eq.s32.totalorder %v398, 0
        %vm471 = vcmp.eq.s32.totalorder %v399, 0
        %vm472 = vcmp.eq.s32.totalorder %v400, 0
        %vm473 = vcmp.eq.s32.totalorder %v401, 0
        %vm474 = vcmp.eq.s32.totalorder %v402, 0
        %vm475 = vcmp.eq.s32.totalorder %v403, 0
        %vm476 = vcmp.eq.s32.totalorder %v404, 0
        %vm477 = vcmp.eq.s32.totalorder %v405, 0
        %vm478 = vcmp.eq.s32.totalorder %v406, 0
        %vm479 = vcmp.eq.s32.totalorder %v407, 0
        %vm480 = vcmp.eq.s32.totalorder %v408, 0
        %vm481 = vcmp.eq.s32.totalorder %v409, 0
        %vm482 = vcmp.eq.s32.totalorder %v410, 0
        %vm483 = vcmp.eq.s32.totalorder %v411, 0
        %vm484 = vcmp.eq.s32.totalorder %v412, 0
        %vm485 = vcmp.eq.s32.totalorder %v413, 0
        %vm486 = vcmp.eq.s32.totalorder %v414, 0
        %vm487 = vcmp.eq.s32.totalorder %v415, 0
        %vm488 = vcmp.eq.s32.totalorder %v416, 0
        %vm489 = vcmp.eq.s32.totalorder %v417, 0
        %vm490 = vcmp.eq.s32.totalorder %v418, 0
        %vm491 = vcmp.eq.s32.totalorder %v419, 0
        %vm492 = vcmp.eq.s32.totalorder %v420, 0
        %vm493 = vcmp.eq.s32.totalorder %v421, 0
        %vm494 = vcmp.eq.s32.totalorder %v422, 0
        %vm495 = vcmp.eq.s32.totalorder %v423, 0
        %vm496 = vcmp.eq.s32.totalorder %v424, 0
        %vm497 = vcmp.eq.s32.totalorder %v425, 0
        %vm498 = vcmp.eq.s32.totalorder %v426, 0
        %vm499 = vcmp.eq.s32.totalorder %v427, 0
        %vm500 = vcmp.eq.s32.totalorder %v428, 0
        %vm501 = vcmp.eq.s32.totalorder %v429, 0
        %vm502 = vcmp.eq.s32.totalorder %v430, 0
        %vm503 = vcmp.eq.s32.totalorder %v431, 0
        %vm504 = vcmp.eq.s32.totalorder %v432, 0
        %vm505 = vcmp.eq.s32.totalorder %v433, 0
        %vm506 = vcmp.eq.s32.totalorder %v434, 0
        %vm507 = vcmp.eq.s32.totalorder %v435, 0
        %vm508 = vcmp.eq.s32.totalorder %v436, 0
        %vm509 = vcmp.eq.s32.totalorder %v437, 0
        %vm510 = vcmp.eq.s32.totalorder %v438, 0
        %vm511 = vcmp.eq.s32.totalorder %v439, 0
        %vm512 = vcmp.eq.s32.totalorder %v440, 0
        %vm513 = vcmp.eq.s32.totalorder %v369, 1
        %vm514 = vcmp.eq.s32.totalorder %v370, 1
        %vm515 = vcmp.eq.s32.totalorder %v371, 1
        %vm516 = vcmp.eq.s32.totalorder %v372, 1
        %vm517 = vcmp.eq.s32.totalorder %v373, 1
        %vm518 = vcmp.eq.s32.totalorder %v374, 1
        %vm519 = vcmp.eq.s32.totalorder %v375, 1
        %vm520 = vcmp.eq.s32.totalorder %v376, 1
        %vm521 = vcmp.eq.s32.totalorder %v377, 1
        %vm522 = vcmp.eq.s32.totalorder %v378, 1
        %vm523 = vcmp.eq.s32.totalorder %v379, 1
        %vm524 = vcmp.eq.s32.totalorder %v380, 1
        %vm525 = vcmp.eq.s32.totalorder %v381, 1
        %vm526 = vcmp.eq.s32.totalorder %v382, 1
        %vm527 = vcmp.eq.s32.totalorder %v383, 1
        %vm528 = vcmp.eq.s32.totalorder %v384, 1
        %vm529 = vcmp.eq.s32.totalorder %v385, 1
        %vm530 = vcmp.eq.s32.totalorder %v386, 1
        %vm531 = vcmp.eq.s32.totalorder %v387, 1
        %vm532 = vcmp.eq.s32.totalorder %v388, 1
        %vm533 = vcmp.eq.s32.totalorder %v389, 1
        %vm534 = vcmp.eq.s32.totalorder %v390, 1
        %vm535 = vcmp.eq.s32.totalorder %v391, 1
        %vm536 = vcmp.eq.s32.totalorder %v392, 1
        %vm537 = vcmp.eq.s32.totalorder %v393, 1
        %vm538 = vcmp.eq.s32.totalorder %v394, 1
        %vm539 = vcmp.eq.s32.totalorder %v395, 1
        %vm540 = vcmp.eq.s32.totalorder %v396, 1
        %vm541 = vcmp.eq.s32.totalorder %v397, 1
        %vm542 = vcmp.eq.s32.totalorder %v398, 1
        %vm543 = vcmp.eq.s32.totalorder %v399, 1
        %vm544 = vcmp.eq.s32.totalorder %v400, 1
        %vm545 = vcmp.eq.s32.totalorder %v401, 1
        %vm546 = vcmp.eq.s32.totalorder %v402, 1
        %vm547 = vcmp.eq.s32.totalorder %v403, 1
        %vm548 = vcmp.eq.s32.totalorder %v404, 1
        %vm549 = vcmp.eq.s32.totalorder %v405, 1
        %vm550 = vcmp.eq.s32.totalorder %v406, 1
        %vm551 = vcmp.eq.s32.totalorder %v407, 1
        %vm552 = vcmp.eq.s32.totalorder %v408, 1
        %vm553 = vcmp.eq.s32.totalorder %v409, 1
        %vm554 = vcmp.eq.s32.totalorder %v410, 1
        %vm555 = vcmp.eq.s32.totalorder %v411, 1
        %vm556 = vcmp.eq.s32.totalorder %v412, 1
        %vm557 = vcmp.eq.s32.totalorder %v413, 1
        %vm558 = vcmp.eq.s32.totalorder %v414, 1
        %vm559 = vcmp.eq.s32.totalorder %v415, 1
        %vm560 = vcmp.eq.s32.totalorder %v416, 1
        %vm561 = vcmp.eq.s32.totalorder %v417, 1
        %vm562 = vcmp.eq.s32.totalorder %v418, 1
        %vm563 = vcmp.eq.s32.totalorder %v419, 1
        %vm564 = vcmp.eq.s32.totalorder %v420, 1
        %vm565 = vcmp.eq.s32.totalorder %v421, 1
        %vm566 = vcmp.eq.s32.totalorder %v422, 1
        %vm567 = vcmp.eq.s32.totalorder %v423, 1
        %vm568 = vcmp.eq.s32.totalorder %v424, 1
        %vm569 = vcmp.eq.s32.totalorder %v425, 1
        %vm570 = vcmp.eq.s32.totalorder %v426, 1
        %vm571 = vcmp.eq.s32.totalorder %v427, 1
        %vm572 = vcmp.eq.s32.totalorder %v428, 1
        %vm573 = vcmp.eq.s32.totalorder %v429, 1
        %vm574 = vcmp.eq.s32.totalorder %v430, 1
        %vm575 = vcmp.eq.s32.totalorder %v431, 1
        %vm576 = vcmp.eq.s32.totalorder %v432, 1
        %vm577 = vcmp.eq.s32.totalorder %v433, 1
        %vm578 = vcmp.eq.s32.totalorder %v434, 1
        %vm579 = vcmp.eq.s32.totalorder %v435, 1
        %vm580 = vcmp.eq.s32.totalorder %v436, 1
        %vm581 = vcmp.eq.s32.totalorder %v437, 1
        %vm582 = vcmp.eq.s32.totalorder %v438, 1
        %vm583 = vcmp.eq.s32.totalorder %v439, 1
        %vm584 = vcmp.eq.s32.totalorder %v440, 1
        %vm585 = vcmp.eq.s32.totalorder %v369, 12
        %vm586 = vcmp.eq.s32.totalorder %v370, 12
        %vm587 = vcmp.eq.s32.totalorder %v371, 12
        %vm588 = vcmp.eq.s32.totalorder %v372, 12
        %vm589 = vcmp.eq.s32.totalorder %v373, 12
        %vm590 = vcmp.eq.s32.totalorder %v374, 12
        %vm591 = vcmp.eq.s32.totalorder %v375, 12
        %vm592 = vcmp.eq.s32.totalorder %v376, 12
        %vm593 = vcmp.eq.s32.totalorder %v377, 12
        %vm594 = vcmp.eq.s32.totalorder %v378, 12
        %vm595 = vcmp.eq.s32.totalorder %v379, 12
        %vm596 = vcmp.eq.s32.totalorder %v380, 12
        %vm597 = vcmp.eq.s32.totalorder %v381, 12
        %vm598 = vcmp.eq.s32.totalorder %v382, 12
        %vm599 = vcmp.eq.s32.totalorder %v383, 12
        %vm600 = vcmp.eq.s32.totalorder %v384, 12
        %vm601 = vcmp.eq.s32.totalorder %v385, 12
        %vm602 = vcmp.eq.s32.totalorder %v386, 12
        %vm603 = vcmp.eq.s32.totalorder %v387, 12
        %vm604 = vcmp.eq.s32.totalorder %v388, 12
        %vm605 = vcmp.eq.s32.totalorder %v389, 12
        %vm606 = vcmp.eq.s32.totalorder %v390, 12
        %vm607 = vcmp.eq.s32.totalorder %v391, 12
        %vm608 = vcmp.eq.s32.totalorder %v392, 12
        %vm609 = vcmp.eq.s32.totalorder %v393, 12
        %vm610 = vcmp.eq.s32.totalorder %v394, 12
        %vm611 = vcmp.eq.s32.totalorder %v395, 12
        %vm612 = vcmp.eq.s32.totalorder %v396, 12
        %vm613 = vcmp.eq.s32.totalorder %v397, 12
        %vm614 = vcmp.eq.s32.totalorder %v398, 12
        %vm615 = vcmp.eq.s32.totalorder %v399, 12
        %vm616 = vcmp.eq.s32.totalorder %v400, 12
        %vm617 = vcmp.eq.s32.totalorder %v401, 12
        %vm618 = vcmp.eq.s32.totalorder %v402, 12
        %vm619 = vcmp.eq.s32.totalorder %v403, 12
        %vm620 = vcmp.eq.s32.totalorder %v404, 12
        %vm621 = vcmp.eq.s32.totalorder %v405, 12
        %vm622 = vcmp.eq.s32.totalorder %v406, 12
        %vm623 = vcmp.eq.s32.totalorder %v407, 12
        %vm624 = vcmp.eq.s32.totalorder %v408, 12
        %vm625 = vcmp.eq.s32.totalorder %v409, 12
        %vm626 = vcmp.eq.s32.totalorder %v410, 12
        %vm627 = vcmp.eq.s32.totalorder %v411, 12
        %vm628 = vcmp.eq.s32.totalorder %v412, 12
        %vm629 = vcmp.eq.s32.totalorder %v413, 12
        %vm630 = vcmp.eq.s32.totalorder %v414, 12
        %vm631 = vcmp.eq.s32.totalorder %v415, 12
        %vm632 = vcmp.eq.s32.totalorder %v416, 12
        %vm633 = vcmp.eq.s32.totalorder %v417, 12
        %vm634 = vcmp.eq.s32.totalorder %v418, 12
        %vm635 = vcmp.eq.s32.totalorder %v419, 12
        %vm636 = vcmp.eq.s32.totalorder %v420, 12
        %vm637 = vcmp.eq.s32.totalorder %v421, 12
        %vm638 = vcmp.eq.s32.totalorder %v422, 12
        %vm639 = vcmp.eq.s32.totalorder %v423, 12
        %vm640 = vcmp.eq.s32.totalorder %v424, 12
        %vm641 = vcmp.eq.s32.totalorder %v425, 12
        %vm642 = vcmp.eq.s32.totalorder %v426, 12
        %vm643 = vcmp.eq.s32.totalorder %v427, 12
        %vm644 = vcmp.eq.s32.totalorder %v428, 12
        %vm645 = vcmp.eq.s32.totalorder %v429, 12
        %vm646 = vcmp.eq.s32.totalorder %v430, 12
        %vm647 = vcmp.eq.s32.totalorder %v431, 12
        %vm648 = vcmp.eq.s32.totalorder %v432, 12
        %vm649 = vcmp.eq.s32.totalorder %v433, 12
        %vm650 = vcmp.eq.s32.totalorder %v434, 12
        %vm651 = vcmp.eq.s32.totalorder %v435, 12
        %vm652 = vcmp.eq.s32.totalorder %v436, 12
        %vm653 = vcmp.eq.s32.totalorder %v437, 12
        %vm654 = vcmp.eq.s32.totalorder %v438, 12
        %vm655 = vcmp.eq.s32.totalorder %v439, 12
        %vm656 = vcmp.eq.s32.totalorder %v440, 12
        %vm657 = vcmp.eq.s32.totalorder %v369, 13
        %vm658 = vcmp.eq.s32.totalorder %v370, 13
        %vm659 = vcmp.eq.s32.totalorder %v371, 13
        %vm660 = vcmp.eq.s32.totalorder %v372, 13
        %vm661 = vcmp.eq.s32.totalorder %v373, 13
        %vm662 = vcmp.eq.s32.totalorder %v374, 13
        %vm663 = vcmp.eq.s32.totalorder %v375, 13
        %vm664 = vcmp.eq.s32.totalorder %v376, 13
        %vm665 = vcmp.eq.s32.totalorder %v377, 13
        %vm666 = vcmp.eq.s32.totalorder %v378, 13
        %vm667 = vcmp.eq.s32.totalorder %v379, 13
        %vm668 = vcmp.eq.s32.totalorder %v380, 13
        %vm669 = vcmp.eq.s32.totalorder %v381, 13
        %vm670 = vcmp.eq.s32.totalorder %v382, 13
        %vm671 = vcmp.eq.s32.totalorder %v383, 13
        %vm672 = vcmp.eq.s32.totalorder %v384, 13
        %vm673 = vcmp.eq.s32.totalorder %v385, 13
        %vm674 = vcmp.eq.s32.totalorder %v386, 13
        %vm675 = vcmp.eq.s32.totalorder %v387, 13
        %vm676 = vcmp.eq.s32.totalorder %v388, 13
        %vm677 = vcmp.eq.s32.totalorder %v389, 13
        %vm678 = vcmp.eq.s32.totalorder %v390, 13
        %vm679 = vcmp.eq.s32.totalorder %v391, 13
        %vm680 = vcmp.eq.s32.totalorder %v392, 13
        %vm681 = vcmp.eq.s32.totalorder %v393, 13
        %vm682 = vcmp.eq.s32.totalorder %v394, 13
        %vm683 = vcmp.eq.s32.totalorder %v395, 13
        %vm684 = vcmp.eq.s32.totalorder %v396, 13
        %vm685 = vcmp.eq.s32.totalorder %v397, 13
        %vm686 = vcmp.eq.s32.totalorder %v398, 13
        %vm687 = vcmp.eq.s32.totalorder %v399, 13
        %vm688 = vcmp.eq.s32.totalorder %v400, 13
        %vm689 = vcmp.eq.s32.totalorder %v401, 13
        %vm690 = vcmp.eq.s32.totalorder %v402, 13
        %vm691 = vcmp.eq.s32.totalorder %v403, 13
        %vm692 = vcmp.eq.s32.totalorder %v404, 13
        %vm693 = vcmp.eq.s32.totalorder %v405, 13
        %vm694 = vcmp.eq.s32.totalorder %v406, 13
        %vm695 = vcmp.eq.s32.totalorder %v407, 13
        %vm696 = vcmp.eq.s32.totalorder %v408, 13
        %vm697 = vcmp.eq.s32.totalorder %v409, 13
        %vm698 = vcmp.eq.s32.totalorder %v410, 13
        %vm699 = vcmp.eq.s32.totalorder %v411, 13
        %vm700 = vcmp.eq.s32.totalorder %v412, 13
        %vm701 = vcmp.eq.s32.totalorder %v413, 13
        %vm702 = vcmp.eq.s32.totalorder %v414, 13
        %vm703 = vcmp.eq.s32.totalorder %v415, 13
        %vm704 = vcmp.eq.s32.totalorder %v416, 13
        %vm705 = vcmp.eq.s32.totalorder %v417, 13
        %vm706 = vcmp.eq.s32.totalorder %v418, 13
        %vm707 = vcmp.eq.s32.totalorder %v419, 13
        %vm708 = vcmp.eq.s32.totalorder %v420, 13
        %vm709 = vcmp.eq.s32.totalorder %v421, 13
        %vm710 = vcmp.eq.s32.totalorder %v422, 13
        %vm711 = vcmp.eq.s32.totalorder %v423, 13
        %vm712 = vcmp.eq.s32.totalorder %v424, 13
        %vm713 = vcmp.eq.s32.totalorder %v425, 13
        %vm714 = vcmp.eq.s32.totalorder %v426, 13
        %vm715 = vcmp.eq.s32.totalorder %v427, 13
        %vm716 = vcmp.eq.s32.totalorder %v428, 13
        %vm717 = vcmp.eq.s32.totalorder %v429, 13
        %vm718 = vcmp.eq.s32.totalorder %v430, 13
        %vm719 = vcmp.eq.s32.totalorder %v431, 13
        %vm720 = vcmp.eq.s32.totalorder %v432, 13
        %vm721 = vcmp.eq.s32.totalorder %v433, 13
        %vm722 = vcmp.eq.s32.totalorder %v434, 13
        %vm723 = vcmp.eq.s32.totalorder %v435, 13
        %vm724 = vcmp.eq.s32.totalorder %v436, 13
        %vm725 = vcmp.eq.s32.totalorder %v437, 13
        %vm726 = vcmp.eq.s32.totalorder %v438, 13
        %vm727 = vcmp.eq.s32.totalorder %v439, 13
        %vm728 = vcmp.eq.s32.totalorder %v440, 13
        %v731 = vlaneseq
        %v732 = vshrl.u32 %v731, 7
        %v733 = vsub.s32 0, %v732
        %v734 = vrot.slane %v316, %v733
        %v735 = vlaneseq
        %v736 = vshrl.u32 %v735, 7
        %v737 = vsub.s32 4, %v736
        %v738 = vrot.slane %v316, %v737
        %v739 = vlaneseq
        %v740 = vshrl.u32 %v739, 7
        %v741 = vsub.s32 0, %v740
        %v742 = vrot.slane %v317, %v741
        %v743 = vlaneseq
        %v744 = vshrl.u32 %v743, 7
        %v745 = vsub.s32 4, %v744
        %v746 = vrot.slane %v317, %v745
        %v751 = vlaneseq
        %v752 = vshrl.u32 %v751, 7
        %v753 = vsub.s32 0, %v752
        %v754 = vrot.slane %v734, %v753
        %v755 = vlaneseq
        %v756 = vshrl.u32 %v755, 7
        %v757 = vsub.s32 0, %v756
        %v758 = vrot.slane %v738, %v757
        %v759 = vlaneseq
        %v760 = vshrl.u32 %v759, 7
        %v761 = vsub.s32 0, %v760
        %v762 = vrot.slane %v742, %v761
        %v763 = vlaneseq
        %v764 = vshrl.u32 %v763, 7
        %v765 = vsub.s32 0, %v764
        %v766 = vrot.slane %v746, %v765
        %v767 = vsel %vm657, %v754, 0.0
        %v768 = vsel %vm658, %v758, 0.0
        %v769 = vsel %vm659, %v762, 0.0
        %v770 = vsel %vm660, %v766, 0.0
        %v771 = vsel %vm661, %v754, 0.0
        %v772 = vsel %vm662, %v758, 0.0
        %v773 = vsel %vm663, %v762, 0.0
        %v774 = vsel %vm664, %v766, 0.0
        %v775 = vsel %vm665, %v754, 0.0
        %v776 = vsel %vm666, %v758, 0.0
        %v777 = vsel %vm667, %v762, 0.0
        %v778 = vsel %vm668, %v766, 0.0
        %v779 = vsel %vm669, %v754, 0.0
        %v780 = vsel %vm670, %v758, 0.0
        %v781 = vsel %vm671, %v762, 0.0
        %v782 = vsel %vm672, %v766, 0.0
        %v783 = vsel %vm673, %v754, 0.0
        %v784 = vsel %vm674, %v758, 0.0
        %v785 = vsel %vm675, %v762, 0.0
        %v786 = vsel %vm676, %v766, 0.0
        %v787 = vsel %vm677, %v754, 0.0
        %v788 = vsel %vm678, %v758, 0.0
        %v789 = vsel %vm679, %v762, 0.0
        %v790 = vsel %vm680, %v766, 0.0
        %v791 = vsel %vm681, %v754, 0.0
        %v792 = vsel %vm682, %v758, 0.0
        %v793 = vsel %vm683, %v762, 0.0
        %v794 = vsel %vm684, %v766, 0.0
        %v795 = vsel %vm685, %v754, 0.0
        %v796 = vsel %vm686, %v758, 0.0
        %v797 = vsel %vm687, %v762, 0.0
        %v798 = vsel %vm688, %v766, 0.0
        %v799 = vsel %vm689, %v754, 0.0
        %v800 = vsel %vm690, %v758, 0.0
        %v801 = vsel %vm691, %v762, 0.0
        %v802 = vsel %vm692, %v766, 0.0
        %v803 = vsel %vm693, %v754, 0.0
        %v804 = vsel %vm694, %v758, 0.0
        %v805 = vsel %vm695, %v762, 0.0
        %v806 = vsel %vm696, %v766, 0.0
        %v807 = vsel %vm697, %v754, 0.0
        %v808 = vsel %vm698, %v758, 0.0
        %v809 = vsel %vm699, %v762, 0.0
        %v810 = vsel %vm700, %v766, 0.0
        %v811 = vsel %vm701, %v754, 0.0
        %v812 = vsel %vm702, %v758, 0.0
        %v813 = vsel %vm703, %v762, 0.0
        %v814 = vsel %vm704, %v766, 0.0
        %v815 = vsel %vm705, %v754, 0.0
        %v816 = vsel %vm706, %v758, 0.0
        %v817 = vsel %vm707, %v762, 0.0
        %v818 = vsel %vm708, %v766, 0.0
        %v819 = vsel %vm709, %v754, 0.0
        %v820 = vsel %vm710, %v758, 0.0
        %v821 = vsel %vm711, %v762, 0.0
        %v822 = vsel %vm712, %v766, 0.0
        %v823 = vsel %vm713, %v754, 0.0
        %v824 = vsel %vm714, %v758, 0.0
        %v825 = vsel %vm715, %v762, 0.0
        %v826 = vsel %vm716, %v766, 0.0
        %v827 = vsel %vm717, %v754, 0.0
        %v828 = vsel %vm718, %v758, 0.0
        %v829 = vsel %vm719, %v762, 0.0
        %v830 = vsel %vm720, %v766, 0.0
        %v831 = vsel %vm721, %v754, 0.0
        %v832 = vsel %vm722, %v758, 0.0
        %v833 = vsel %vm723, %v762, 0.0
        %v834 = vsel %vm724, %v766, 0.0
        %v835 = vsel %vm725, %v754, 0.0
        %v836 = vsel %vm726, %v758, 0.0
        %v837 = vsel %vm727, %v762, 0.0
        %v838 = vsel %vm728, %v766, 0.0
        %v841 = vlaneseq
        %v842 = vshrl.u32 %v841, 7
        %v843 = vsub.s32 0, %v842
        %v844 = vrot.slane %v312, %v843
        %v845 = vlaneseq
        %v846 = vshrl.u32 %v845, 7
        %v847 = vsub.s32 4, %v846
        %v848 = vrot.slane %v312, %v847
        %v849 = vlaneseq
        %v850 = vshrl.u32 %v849, 7
        %v851 = vsub.s32 0, %v850
        %v852 = vrot.slane %v313, %v851
        %v853 = vlaneseq
        %v854 = vshrl.u32 %v853, 7
        %v855 = vsub.s32 4, %v854
        %v856 = vrot.slane %v313, %v855
        %v861 = vlaneseq
        %v862 = vshrl.u32 %v861, 7
        %v863 = vsub.s32 0, %v862
        %v864 = vrot.slane %v844, %v863
        %v865 = vlaneseq
        %v866 = vshrl.u32 %v865, 7
        %v867 = vsub.s32 0, %v866
        %v868 = vrot.slane %v848, %v867
        %v869 = vlaneseq
        %v870 = vshrl.u32 %v869, 7
        %v871 = vsub.s32 0, %v870
        %v872 = vrot.slane %v852, %v871
        %v873 = vlaneseq
        %v874 = vshrl.u32 %v873, 7
        %v875 = vsub.s32 0, %v874
        %v876 = vrot.slane %v856, %v875
        %v877 = vsel %vm585, %v864, %v767
        %v878 = vsel %vm586, %v868, %v768
        %v879 = vsel %vm587, %v872, %v769
        %v880 = vsel %vm588, %v876, %v770
        %v881 = vsel %vm589, %v864, %v771
        %v882 = vsel %vm590, %v868, %v772
        %v883 = vsel %vm591, %v872, %v773
        %v884 = vsel %vm592, %v876, %v774
        %v885 = vsel %vm593, %v864, %v775
        %v886 = vsel %vm594, %v868, %v776
        %v887 = vsel %vm595, %v872, %v777
        %v888 = vsel %vm596, %v876, %v778
        %v889 = vsel %vm597, %v864, %v779
        %v890 = vsel %vm598, %v868, %v780
        %v891 = vsel %vm599, %v872, %v781
        %v892 = vsel %vm600, %v876, %v782
        %v893 = vsel %vm601, %v864, %v783
        %v894 = vsel %vm602, %v868, %v784
        %v895 = vsel %vm603, %v872, %v785
        %v896 = vsel %vm604, %v876, %v786
        %v897 = vsel %vm605, %v864, %v787
        %v898 = vsel %vm606, %v868, %v788
        %v899 = vsel %vm607, %v872, %v789
        %v900 = vsel %vm608, %v876, %v790
        %v901 = vsel %vm609, %v864, %v791
        %v902 = vsel %vm610, %v868, %v792
        %v903 = vsel %vm611, %v872, %v793
        %v904 = vsel %vm612, %v876, %v794
        %v905 = vsel %vm613, %v864, %v795
        %v906 = vsel %vm614, %v868, %v796
        %v907 = vsel %vm615, %v872, %v797
        %v908 = vsel %vm616, %v876, %v798
        %v909 = vsel %vm617, %v864, %v799
        %v910 = vsel %vm618, %v868, %v800
        %v911 = vsel %vm619, %v872, %v801
        %v912 = vsel %vm620, %v876, %v802
        %v913 = vsel %vm621, %v864, %v803
        %v914 = vsel %vm622, %v868, %v804
        %v915 = vsel %vm623, %v872, %v805
        %v916 = vsel %vm624, %v876, %v806
        %v917 = vsel %vm625, %v864, %v807
        %v918 = vsel %vm626, %v868, %v808
        %v919 = vsel %vm627, %v872, %v809
        %v920 = vsel %vm628, %v876, %v810
        %v921 = vsel %vm629, %v864, %v811
        %v922 = vsel %vm630, %v868, %v812
        %v923 = vsel %vm631, %v872, %v813
        %v924 = vsel %vm632, %v876, %v814
        %v925 = vsel %vm633, %v864, %v815
        %v926 = vsel %vm634, %v868, %v816
        %v927 = vsel %vm635, %v872, %v817
        %v928 = vsel %vm636, %v876, %v818
        %v929 = vsel %vm637, %v864, %v819
        %v930 = vsel %vm638, %v868, %v820
        %v931 = vsel %vm639, %v872, %v821
        %v932 = vsel %vm640, %v876, %v822
        %v933 = vsel %vm641, %v864, %v823
        %v934 = vsel %vm642, %v868, %v824
        %v935 = vsel %vm643, %v872, %v825
        %v936 = vsel %vm644, %v876, %v826
        %v937 = vsel %vm645, %v864, %v827
        %v938 = vsel %vm646, %v868, %v828
        %v939 = vsel %vm647, %v872, %v829
        %v940 = vsel %vm648, %v876, %v830
        %v941 = vsel %vm649, %v864, %v831
        %v942 = vsel %vm650, %v868, %v832
        %v943 = vsel %vm651, %v872, %v833
        %v944 = vsel %vm652, %v876, %v834
        %v945 = vsel %vm653, %v864, %v835
        %v946 = vsel %vm654, %v868, %v836
        %v947 = vsel %vm655, %v872, %v837
        %v948 = vsel %vm656, %v876, %v838
        %v951 = vlaneseq
        %v952 = vshrl.u32 %v951, 7
        %v953 = vsub.s32 0, %v952
        %v954 = vrot.slane %v300, %v953
        %v955 = vlaneseq
        %v956 = vshrl.u32 %v955, 7
        %v957 = vsub.s32 4, %v956
        %v958 = vrot.slane %v300, %v957
        %v959 = vlaneseq
        %v960 = vshrl.u32 %v959, 7
        %v961 = vsub.s32 0, %v960
        %v962 = vrot.slane %v301, %v961
        %v963 = vlaneseq
        %v964 = vshrl.u32 %v963, 7
        %v965 = vsub.s32 4, %v964
        %v966 = vrot.slane %v301, %v965
        %v971 = vlaneseq
        %v972 = vshrl.u32 %v971, 7
        %v973 = vsub.s32 0, %v972
        %v974 = vrot.slane %v954, %v973
        %v975 = vlaneseq
        %v976 = vshrl.u32 %v975, 7
        %v977 = vsub.s32 0, %v976
        %v978 = vrot.slane %v958, %v977
        %v979 = vlaneseq
        %v980 = vshrl.u32 %v979, 7
        %v981 = vsub.s32 0, %v980
        %v982 = vrot.slane %v962, %v981
        %v983 = vlaneseq
        %v984 = vshrl.u32 %v983, 7
        %v985 = vsub.s32 0, %v984
        %v986 = vrot.slane %v966, %v985
        %v987 = vsel %vm513, %v974, %v877
        %v988 = vsel %vm514, %v978, %v878
        %v989 = vsel %vm515, %v982, %v879
        %v990 = vsel %vm516, %v986, %v880
        %v991 = vsel %vm517, %v974, %v881
        %v992 = vsel %vm518, %v978, %v882
        %v993 = vsel %vm519, %v982, %v883
        %v994 = vsel %vm520, %v986, %v884
        %v995 = vsel %vm521, %v974, %v885
        %v996 = vsel %vm522, %v978, %v886
        %v997 = vsel %vm523, %v982, %v887
        %v998 = vsel %vm524, %v986, %v888
        %v999 = vsel %vm525, %v974, %v889
        %v1000 = vsel %vm526, %v978, %v890
        %v1001 = vsel %vm527, %v982, %v891
        %v1002 = vsel %vm528, %v986, %v892
        %v1003 = vsel %vm529, %v974, %v893
        %v1004 = vsel %vm530, %v978, %v894
        %v1005 = vsel %vm531, %v982, %v895
        %v1006 = vsel %vm532, %v986, %v896
        %v1007 = vsel %vm533, %v974, %v897
        %v1008 = vsel %vm534, %v978, %v898
        %v1009 = vsel %vm535, %v982, %v899
        %v1010 = vsel %vm536, %v986, %v900
        %v1011 = vsel %vm537, %v974, %v901
        %v1012 = vsel %vm538, %v978, %v902
        %v1013 = vsel %vm539, %v982, %v903
        %v1014 = vsel %vm540, %v986, %v904
        %v1015 = vsel %vm541, %v974, %v905
        %v1016 = vsel %vm542, %v978, %v906
        %v1017 = vsel %vm543, %v982, %v907
        %v1018 = vsel %vm544, %v986, %v908
        %v1019 = vsel %vm545, %v974, %v909
        %v1020 = vsel %vm546, %v978, %v910
        %v1021 = vsel %vm547, %v982, %v911
        %v1022 = vsel %vm548, %v986, %v912
        %v1023 = vsel %vm549, %v974, %v913
        %v1024 = vsel %vm550, %v978, %v914
        %v1025 = vsel %vm551, %v982, %v915
        %v1026 = vsel %vm552, %v986, %v916
        %v1027 = vsel %vm553, %v974, %v917
        %v1028 = vsel %vm554, %v978, %v918
        %v1029 = vsel %vm555, %v982, %v919
        %v1030 = vsel %vm556, %v986, %v920
        %v1031 = vsel %vm557, %v974, %v921
        %v1032 = vsel %vm558, %v978, %v922
        %v1033 = vsel %vm559, %v982, %v923
        %v1034 = vsel %vm560, %v986, %v924
        %v1035 = vsel %vm561, %v974, %v925
        %v1036 = vsel %vm562, %v978, %v926
        %v1037 = vsel %vm563, %v982, %v927
        %v1038 = vsel %vm564, %v986, %v928
        %v1039 = vsel %vm565, %v974, %v929
        %v1040 = vsel %vm566, %v978, %v930
        %v1041 = vsel %vm567, %v982, %v931
        %v1042 = vsel %vm568, %v986, %v932
        %v1043 = vsel %vm569, %v974, %v933
        %v1044 = vsel %vm570, %v978, %v934
        %v1045 = vsel %vm571, %v982, %v935
        %v1046 = vsel %vm572, %v986, %v936
        %v1047 = vsel %vm573, %v974, %v937
        %v1048 = vsel %vm574, %v978, %v938
        %v1049 = vsel %vm575, %v982, %v939
        %v1050 = vsel %vm576, %v986, %v940
        %v1051 = vsel %vm577, %v974, %v941
        %v1052 = vsel %vm578, %v978, %v942
        %v1053 = vsel %vm579, %v982, %v943
        %v1054 = vsel %vm580, %v986, %v944
        %v1055 = vsel %vm581, %v974, %v945
        %v1056 = vsel %vm582, %v978, %v946
        %v1057 = vsel %vm583, %v982, %v947
        %v1058 = vsel %vm584, %v986, %v948
        %v1061 = vlaneseq
        %v1062 = vshrl.u32 %v1061, 7
        %v1063 = vsub.s32 0, %v1062
        %v1064 = vrot.slane %v296, %v1063
        %v1065 = vlaneseq
        %v1066 = vshrl.u32 %v1065, 7
        %v1067 = vsub.s32 4, %v1066
        %v1068 = vrot.slane %v296, %v1067
        %v1069 = vlaneseq
        %v1070 = vshrl.u32 %v1069, 7
        %v1071 = vsub.s32 0, %v1070
        %v1072 = vrot.slane %v297, %v1071
        %v1073 = vlaneseq
        %v1074 = vshrl.u32 %v1073, 7
        %v1075 = vsub.s32 4, %v1074
        %v1076 = vrot.slane %v297, %v1075
        %v1081 = vlaneseq
        %v1082 = vshrl.u32 %v1081, 7
        %v1083 = vsub.s32 0, %v1082
        %v1084 = vrot.slane %v1064, %v1083
        %v1085 = vlaneseq
        %v1086 = vshrl.u32 %v1085, 7
        %v1087 = vsub.s32 0, %v1086
        %v1088 = vrot.slane %v1068, %v1087
        %v1089 = vlaneseq
        %v1090 = vshrl.u32 %v1089, 7
        %v1091 = vsub.s32 0, %v1090
        %v1092 = vrot.slane %v1072, %v1091
        %v1093 = vlaneseq
        %v1094 = vshrl.u32 %v1093, 7
        %v1095 = vsub.s32 0, %v1094
        %v1096 = vrot.slane %v1076, %v1095
        %v1097 = vsel %vm441, %v1084, %v987
        %v1098 = vsel %vm442, %v1088, %v988
        %v1099 = vsel %vm443, %v1092, %v989
        %v1100 = vsel %vm444, %v1096, %v990
        %v1101 = vsel %vm445, %v1084, %v991
        %v1102 = vsel %vm446, %v1088, %v992
        %v1103 = vsel %vm447, %v1092, %v993
        %v1104 = vsel %vm448, %v1096, %v994
        %v1105 = vsel %vm449, %v1084, %v995
        %v1106 = vsel %vm450, %v1088, %v996
        %v1107 = vsel %vm451, %v1092, %v997
        %v1108 = vsel %vm452, %v1096, %v998
        %v1109 = vsel %vm453, %v1084, %v999
        %v1110 = vsel %vm454, %v1088, %v1000
        %v1111 = vsel %vm455, %v1092, %v1001
        %v1112 = vsel %vm456, %v1096, %v1002
        %v1113 = vsel %vm457, %v1084, %v1003
        %v1114 = vsel %vm458, %v1088, %v1004
        %v1115 = vsel %vm459, %v1092, %v1005
        %v1116 = vsel %vm460, %v1096, %v1006
        %v1117 = vsel %vm461, %v1084, %v1007
        %v1118 = vsel %vm462, %v1088, %v1008
        %v1119 = vsel %vm463, %v1092, %v1009
        %v1120 = vsel %vm464, %v1096, %v1010
        %v1121 = vsel %vm465, %v1084, %v1011
        %v1122 = vsel %vm466, %v1088, %v1012
        %v1123 = vsel %vm467, %v1092, %v1013
        %v1124 = vsel %vm468, %v1096, %v1014
        %v1125 = vsel %vm469, %v1084, %v1015
        %v1126 = vsel %vm470, %v1088, %v1016
        %v1127 = vsel %vm471, %v1092, %v1017
        %v1128 = vsel %vm472, %v1096, %v1018
        %v1129 = vsel %vm473, %v1084, %v1019
        %v1130 = vsel %vm474, %v1088, %v1020
        %v1131 = vsel %vm475, %v1092, %v1021
        %v1132 = vsel %vm476, %v1096, %v1022
        %v1133 = vsel %vm477, %v1084, %v1023
        %v1134 = vsel %vm478, %v1088, %v1024
        %v1135 = vsel %vm479, %v1092, %v1025
        %v1136 = vsel %vm480, %v1096, %v1026
        %v1137 = vsel %vm481, %v1084, %v1027
        %v1138 = vsel %vm482, %v1088, %v1028
        %v1139 = vsel %vm483, %v1092, %v1029
        %v1140 = vsel %vm484, %v1096, %v1030
        %v1141 = vsel %vm485, %v1084, %v1031
        %v1142 = vsel %vm486, %v1088, %v1032
        %v1143 = vsel %vm487, %v1092, %v1033
        %v1144 = vsel %vm488, %v1096, %v1034
        %v1145 = vsel %vm489, %v1084, %v1035
        %v1146 = vsel %vm490, %v1088, %v1036
        %v1147 = vsel %vm491, %v1092, %v1037
        %v1148 = vsel %vm492, %v1096, %v1038
        %v1149 = vsel %vm493, %v1084, %v1039
        %v1150 = vsel %vm494, %v1088, %v1040
        %v1151 = vsel %vm495, %v1092, %v1041
        %v1152 = vsel %vm496, %v1096, %v1042
        %v1153 = vsel %vm497, %v1084, %v1043
        %v1154 = vsel %vm498, %v1088, %v1044
        %v1155 = vsel %vm499, %v1092, %v1045
        %v1156 = vsel %vm500, %v1096, %v1046
        %v1157 = vsel %vm501, %v1084, %v1047
        %v1158 = vsel %vm502, %v1088, %v1048
        %v1159 = vsel %vm503, %v1092, %v1049
        %v1160 = vsel %vm504, %v1096, %v1050
        %v1161 = vsel %vm505, %v1084, %v1051
        %v1162 = vsel %vm506, %v1088, %v1052
        %v1163 = vsel %vm507, %v1092, %v1053
        %v1164 = vsel %vm508, %v1096, %v1054
        %v1165 = vsel %vm509, %v1084, %v1055
        %v1166 = vsel %vm510, %v1088, %v1056
        %v1167 = vsel %vm511, %v1092, %v1057
        %v1168 = vsel %vm512, %v1096, %v1058
        %v1169 = vld [vmem:[%s209] sm:$0xff]
        %v1170 = vld [vmem:[%s209 + $0x8] sm:$0xff]
        %v1171 = vld [vmem:[%s209 + $0x10] sm:$0xff]
        %v1172 = vld [vmem:[%s209 + $0x18] sm:$0xff]
        %v1173 = vld [vmem:[%s209 + $0x20] sm:$0xff]
        %v1174 = vld [vmem:[%s209 + $0x28] sm:$0xff]
        %v1175 = vld [vmem:[%s209 + $0x30] sm:$0xff]
        %v1176 = vld [vmem:[%s209 + $0x38] sm:$0xff]
        %v1177 = vpack.c.bf16 %v1101, %v1097
        %v1178 = vpack.c.bf16 %v1102, %v1098
        %v1179 = vpack.c.bf16 %v1103, %v1099
        %v1180 = vpack.c.bf16 %v1104, %v1100
        %v1181 = vpack.c.bf16 %v1109, %v1105
        %v1182 = vpack.c.bf16 %v1110, %v1106
        %v1183 = vpack.c.bf16 %v1111, %v1107
        %v1184 = vpack.c.bf16 %v1112, %v1108
        %v1185 = vpack.c.bf16 %v1117, %v1113
        %v1186 = vpack.c.bf16 %v1118, %v1114
        %v1187 = vpack.c.bf16 %v1119, %v1115
        %v1188 = vpack.c.bf16 %v1120, %v1116
        %v1189 = vpack.c.bf16 %v1125, %v1121
        %v1190 = vpack.c.bf16 %v1126, %v1122
        %v1191 = vpack.c.bf16 %v1127, %v1123
        %v1192 = vpack.c.bf16 %v1128, %v1124
        %v1193 = vpack.c.bf16 %v1133, %v1129
        %v1194 = vpack.c.bf16 %v1134, %v1130
        %v1195 = vpack.c.bf16 %v1135, %v1131
        %v1196 = vpack.c.bf16 %v1136, %v1132
        %v1197 = vpack.c.bf16 %v1141, %v1137
        %v1198 = vpack.c.bf16 %v1142, %v1138
        %v1199 = vpack.c.bf16 %v1143, %v1139
        %v1200 = vpack.c.bf16 %v1144, %v1140
        %v1201 = vpack.c.bf16 %v1149, %v1145
        %v1202 = vpack.c.bf16 %v1150, %v1146
        %v1203 = vpack.c.bf16 %v1151, %v1147
        %v1204 = vpack.c.bf16 %v1152, %v1148
        %v1205 = vpack.c.bf16 %v1157, %v1153
        %v1206 = vpack.c.bf16 %v1158, %v1154
        %v1207 = vpack.c.bf16 %v1159, %v1155
        %v1208 = vpack.c.bf16 %v1160, %v1156
        %v1209 = vpack.c.bf16 %v1165, %v1161
        %v1210 = vpack.c.bf16 %v1166, %v1162
        %v1211 = vpack.c.bf16 %v1167, %v1163
        %v1212 = vpack.c.bf16 %v1168, %v1164
        %v1221 = vunpack.c.l.b16 %v1169
        %v1222 = vunpack.c.h.b16 %v1169
        %v1223 = vunpack.c.l.b16 %v1170
        %v1224 = vunpack.c.h.b16 %v1170
        %v1225 = vunpack.c.l.b16 %v1171
        %v1226 = vunpack.c.h.b16 %v1171
        %v1227 = vunpack.c.l.b16 %v1172
        %v1228 = vunpack.c.h.b16 %v1172
        %v1229 = vunpack.c.l.b16 %v1173
        %v1230 = vunpack.c.h.b16 %v1173
        %v1231 = vunpack.c.l.b16 %v1174
        %v1232 = vunpack.c.h.b16 %v1174
        %v1233 = vunpack.c.l.b16 %v1175
        %v1234 = vunpack.c.h.b16 %v1175
        %v1235 = vunpack.c.l.b16 %v1176
        %v1236 = vunpack.c.h.b16 %v1176
        %v1237 = vpack.c.b16 %v1223, %v1221
        %v1238 = vpack.c.b16 %v1224, %v1222
        %v1239 = vpack.c.b16 %v1227, %v1225
        %v1240 = vpack.c.b16 %v1228, %v1226
        %v1241 = vpack.c.b16 %v1231, %v1229
        %v1242 = vpack.c.b16 %v1232, %v1230
        %v1243 = vpack.c.b16 %v1235, %v1233
        %v1244 = vpack.c.b16 %v1236, %v1234
        %vm1249 = vcmask 130048
        %v1251 = vsel %vm1249, %v1238, 0
        %v1254 = vsel %vm1249, %v1240, 0
        %v1257 = vsel %vm1249, %v1242, 0
        %v1260 = vsel %vm1249, %v1244, 0
        %1262 = vmatprep.subr.bf16.mxu0 %v1206
        %1263 = vmatpush1.bf16.msra.mxu0 %v1205
        %1264 = vmatprep.subr.bf16.mxu0 %v1202
        %1265 = vmatpush1.bf16.msra.mxu0 %v1201
        %1266 = vmatprep.subr.bf16.mxu0 %v1198
        %1267 = vmatpush1.bf16.msra.mxu0 %v1197
        %1268 = vmatprep.subr.bf16.mxu0 %v1194
        %1269 = vmatpush1.bf16.msra.mxu0 %v1193
        %1270 = vmatprep.subr.bf16.mxu0 %v1190
        %1271 = vmatpush1.bf16.msra.mxu0 %v1189
        %1272 = vmatprep.subr.bf16.mxu0 %v1186
        %1273 = vmatpush1.bf16.msra.mxu0 %v1185
        %1274 = vmatprep.subr.bf16.mxu0 %v1182
        %1275 = vmatpush1.bf16.msra.mxu0 %v1181
        %1276 = vmatprep.subr.bf16.mxu0 %v1178
        %1277 = vmatpush1.bf16.msra.mxu0 %v1177
        %1278 = vmatprep.subr.bf16.mxu0 0
        %1279 = vmatpush2.bf16.msra.mxu0 0
        %1280 = vmatprep.subr.bf16.mxu0 0
        %1281 = vmatpush2.bf16.msra.mxu0 0
        %1282 = vmatprep.subr.bf16.mxu0 0
        %1283 = vmatpush2.bf16.msra.mxu0 0
        %1284 = vmatprep.subr.bf16.mxu0 0
        %1285 = vmatpush2.bf16.msra.mxu0 0
        %1286 = vmatprep.subr.bf16.mxu0 0
        %1287 = vmatpush2.bf16.msra.mxu0 0
        %1288 = vmatprep.subr.bf16.mxu0 0
        %1289 = vmatpush2.bf16.msra.mxu0 0
        %1290 = vmatprep.subr.bf16.mxu0 0
        %1291 = vmatpush2.bf16.msra.mxu0 0
        %1292 = vmatprep.subr.bf16.mxu0 %v1210
        %1293 = vmatpush2.bf16.msra.mxu0 %v1209
        %1294 = vmatprep.mubr.bf16.mxu0 %v1251
        %1295 = vmatmul.mubr.bf16.gmra.mxu0 %v1237
        %v1296 = vpop.f32.mrf.mxu0
        %v1297 = vadd.f32 0.0, %v1296
        %v1298 = vpop.f32.mrf.mxu0
        %v1299 = vadd.f32 0.0, %v1298
        %v1300 = vpop.f32.mrf.mxu0
        %v1301 = vadd.f32 0.0, %v1300
        %v1302 = vpop.f32.mrf.mxu0
        %v1303 = vadd.f32 0.0, %v1302
        %1304 = vmatprep.mubr.bf16.mxu0 %v1254
        %1305 = vmatmul.mubr.bf16.gmra.mxu0 %v1239
        %v1306 = vpop.f32.mrf.mxu0
        %v1307 = vadd.f32 0.0, %v1306
        %v1308 = vpop.f32.mrf.mxu0
        %v1309 = vadd.f32 0.0, %v1308
        %v1310 = vpop.f32.mrf.mxu0
        %v1311 = vadd.f32 0.0, %v1310
        %v1312 = vpop.f32.mrf.mxu0
        %v1313 = vadd.f32 0.0, %v1312
        %1314 = vmatprep.mubr.bf16.mxu0 %v1257
        %1315 = vmatmul.mubr.bf16.gmra.mxu0 %v1241
        %v1316 = vpop.f32.mrf.mxu0
        %v1317 = vadd.f32 0.0, %v1316
        %v1318 = vpop.f32.mrf.mxu0
        %v1319 = vadd.f32 0.0, %v1318
        %v1320 = vpop.f32.mrf.mxu0
        %v1321 = vadd.f32 0.0, %v1320
        %v1322 = vpop.f32.mrf.mxu0
        %v1323 = vadd.f32 0.0, %v1322
        %1324 = vmatprep.mubr.bf16.mxu0 %v1260
        %1325 = vmatmul.mubr.bf16.gmra.mxu0 %v1243
        %v1326 = vpop.f32.mrf.mxu0
        %v1327 = vadd.f32 0.0, %v1326
        %v1328 = vpop.f32.mrf.mxu0
        %v1329 = vadd.f32 0.0, %v1328
        %v1330 = vpop.f32.mrf.mxu0
        %v1331 = vadd.f32 0.0, %v1330
        %v1332 = vpop.f32.mrf.mxu0
        %v1333 = vadd.f32 0.0, %v1332
        %1334 = vdwg.mxu0
        %1335 = vmatprep.subr.bf16.mxu0 %v1208
        %1336 = vmatpush1.bf16.msra.mxu0 %v1207
        %1337 = vmatprep.subr.bf16.mxu0 %v1204
        %1338 = vmatpush1.bf16.msra.mxu0 %v1203
        %1339 = vmatprep.subr.bf16.mxu0 %v1200
        %1340 = vmatpush1.bf16.msra.mxu0 %v1199
        %1341 = vmatprep.subr.bf16.mxu0 %v1196
        %1342 = vmatpush1.bf16.msra.mxu0 %v1195
        %1343 = vmatprep.subr.bf16.mxu0 %v1192
        %1344 = vmatpush1.bf16.msra.mxu0 %v1191
        %1345 = vmatprep.subr.bf16.mxu0 %v1188
        %1346 = vmatpush1.bf16.msra.mxu0 %v1187
        %1347 = vmatprep.subr.bf16.mxu0 %v1184
        %1348 = vmatpush1.bf16.msra.mxu0 %v1183
        %1349 = vmatprep.subr.bf16.mxu0 %v1180
        %1350 = vmatpush1.bf16.msra.mxu0 %v1179
        %1351 = vmatprep.subr.bf16.mxu0 0
        %1352 = vmatpush2.bf16.msra.mxu0 0
        %1353 = vmatprep.subr.bf16.mxu0 0
        %1354 = vmatpush2.bf16.msra.mxu0 0
        %1355 = vmatprep.subr.bf16.mxu0 0
        %1356 = vmatpush2.bf16.msra.mxu0 0
        %1357 = vmatprep.subr.bf16.mxu0 0
        %1358 = vmatpush2.bf16.msra.mxu0 0
        %1359 = vmatprep.subr.bf16.mxu0 0
        %1360 = vmatpush2.bf16.msra.mxu0 0
        %1361 = vmatprep.subr.bf16.mxu0 0
        %1362 = vmatpush2.bf16.msra.mxu0 0
        %1363 = vmatprep.subr.bf16.mxu0 0
        %1364 = vmatpush2.bf16.msra.mxu0 0
        %1365 = vmatprep.subr.bf16.mxu0 %v1212
        %1366 = vmatpush2.bf16.msra.mxu0 %v1211
        %1367 = vmatprep.mubr.bf16.mxu0 %v1251
        %1368 = vmatmul.mubr.bf16.gmra.mxu0 %v1237
        %v1369 = vpop.f32.mrf.mxu0
        %v1370 = vadd.f32 0.0, %v1369
        %v1371 = vpop.f32.mrf.mxu0
        %v1372 = vadd.f32 0.0, %v1371
        %v1373 = vpop.f32.mrf.mxu0
        %v1374 = vadd.f32 0.0, %v1373
        %v1375 = vpop.f32.mrf.mxu0
        %v1376 = vadd.f32 0.0, %v1375
        %1377 = vmatprep.mubr.bf16.mxu0 %v1254
        %1378 = vmatmul.mubr.bf16.gmra.mxu0 %v1239
        %v1379 = vpop.f32.mrf.mxu0
        %v1380 = vadd.f32 0.0, %v1379
        %v1381 = vpop.f32.mrf.mxu0
        %v1382 = vadd.f32 0.0, %v1381
        %v1383 = vpop.f32.mrf.mxu0
        %v1384 = vadd.f32 0.0, %v1383
        %v1385 = vpop.f32.mrf.mxu0
        %v1386 = vadd.f32 0.0, %v1385
        %1387 = vmatprep.mubr.bf16.mxu0 %v1257
        %1388 = vmatmul.mubr.bf16.gmra.mxu0 %v1241
        %v1389 = vpop.f32.mrf.mxu0
        %v1390 = vadd.f32 0.0, %v1389
        %v1391 = vpop.f32.mrf.mxu0
        %v1392 = vadd.f32 0.0, %v1391
        %v1393 = vpop.f32.mrf.mxu0
        %v1394 = vadd.f32 0.0, %v1393
        %v1395 = vpop.f32.mrf.mxu0
        %v1396 = vadd.f32 0.0, %v1395
        %1397 = vmatprep.mubr.bf16.mxu0 %v1260
        %1398 = vmatmul.mubr.bf16.gmra.mxu0 %v1243
        %v1399 = vpop.f32.mrf.mxu0
        %v1400 = vadd.f32 0.0, %v1399
        %v1401 = vpop.f32.mrf.mxu0
        %v1402 = vadd.f32 0.0, %v1401
        %v1403 = vpop.f32.mrf.mxu0
        %v1404 = vadd.f32 0.0, %v1403
        %v1405 = vpop.f32.mrf.mxu0
        %v1406 = vadd.f32 0.0, %v1405
        %1407 = vdwg.mxu0
        %v1408 = vlaneseq
        %v1409 = vshrl.u32 %v1408, 7
        %v1410 = vsub.s32 2, %v1409
        %v1411 = vrot.slane %v268, %v1410
        %v1412 = vlaneseq
        %v1413 = vshrl.u32 %v1412, 7
        %v1414 = vsub.s32 6, %v1413
        %v1415 = vrot.slane %v268, %v1414
        %v1416 = vlaneseq
        %v1417 = vshrl.u32 %v1416, 7
        %v1418 = vsub.s32 2, %v1417
        %v1419 = vrot.slane %v269, %v1418
        %v1420 = vlaneseq
        %v1421 = vshrl.u32 %v1420, 7
        %v1422 = vsub.s32 6, %v1421
        %v1423 = vrot.slane %v269, %v1422
        %v1424 = vlaneseq
        %v1425 = vshrl.u32 %v1424, 7
        %v1426 = vsub.s32 2, %v1425
        %v1427 = vrot.slane %v1411, %v1426
        %v1428 = vlaneseq
        %v1429 = vshrl.u32 %v1428, 7
        %v1430 = vsub.s32 2, %v1429
        %v1431 = vrot.slane %v1415, %v1430
        %v1432 = vlaneseq
        %v1433 = vshrl.u32 %v1432, 7
        %v1434 = vsub.s32 2, %v1433
        %v1435 = vrot.slane %v1419, %v1434
        %v1436 = vlaneseq
        %v1437 = vshrl.u32 %v1436, 7
        %v1438 = vsub.s32 2, %v1437
        %v1439 = vrot.slane %v1423, %v1438
        %vm1440 = vcmp.eq.s32.totalorder %v319, %v1427
        %vm1441 = vcmp.eq.s32.totalorder %v319, %v1431
        %vm1442 = vcmp.eq.s32.totalorder %v319, %v1435
        %vm1443 = vcmp.eq.s32.totalorder %v319, %v1439
        %v1444 = vsub.f32 1.0, %v252
        %v1445 = vsub.f32 1.0, %v253
        %v1448 = vlaneseq
        %v1449 = vshrl.u32 %v1448, 7
        %v1450 = vsub.s32 2, %v1449
        %v1451 = vrot.slane %v1444, %v1450
        %v1452 = vlaneseq
        %v1453 = vshrl.u32 %v1452, 7
        %v1454 = vsub.s32 6, %v1453
        %v1455 = vrot.slane %v1444, %v1454
        %v1456 = vlaneseq
        %v1457 = vshrl.u32 %v1456, 7
        %v1458 = vsub.s32 2, %v1457
        %v1459 = vrot.slane %v1445, %v1458
        %v1460 = vlaneseq
        %v1461 = vshrl.u32 %v1460, 7
        %v1462 = vsub.s32 6, %v1461
        %v1463 = vrot.slane %v1445, %v1462
        %v1468 = vlaneseq
        %v1469 = vshrl.u32 %v1468, 7
        %v1470 = vsub.s32 2, %v1469
        %v1471 = vrot.slane %v1451, %v1470
        %v1472 = vlaneseq
        %v1473 = vshrl.u32 %v1472, 7
        %v1474 = vsub.s32 2, %v1473
        %v1475 = vrot.slane %v1455, %v1474
        %v1476 = vlaneseq
        %v1477 = vshrl.u32 %v1476, 7
        %v1478 = vsub.s32 2, %v1477
        %v1479 = vrot.slane %v1459, %v1478
        %v1480 = vlaneseq
        %v1481 = vshrl.u32 %v1480, 7
        %v1482 = vsub.s32 2, %v1481
        %v1483 = vrot.slane %v1463, %v1482
        %v1484 = vsel %vm1440, %v1471, 0.0
        %v1485 = vsel %vm1441, %v1475, 0.0
        %v1486 = vsel %vm1442, %v1479, 0.0
        %v1487 = vsel %vm1443, %v1483, 0.0
        %v1488 = vadd.s32 %v268, 1
        %v1489 = vadd.s32 %v269, 1
        %v1490 = vlaneseq
        %v1491 = vshrl.u32 %v1490, 7
        %v1492 = vsub.s32 2, %v1491
        %v1493 = vrot.slane %v1488, %v1492
        %v1494 = vlaneseq
        %v1495 = vshrl.u32 %v1494, 7
        %v1496 = vsub.s32 6, %v1495
        %v1497 = vrot.slane %v1488, %v1496
        %v1498 = vlaneseq
        %v1499 = vshrl.u32 %v1498, 7
        %v1500 = vsub.s32 2, %v1499
        %v1501 = vrot.slane %v1489, %v1500
        %v1502 = vlaneseq
        %v1503 = vshrl.u32 %v1502, 7
        %v1504 = vsub.s32 6, %v1503
        %v1505 = vrot.slane %v1489, %v1504
        %v1506 = vlaneseq
        %v1507 = vshrl.u32 %v1506, 7
        %v1508 = vsub.s32 2, %v1507
        %v1509 = vrot.slane %v1493, %v1508
        %v1510 = vlaneseq
        %v1511 = vshrl.u32 %v1510, 7
        %v1512 = vsub.s32 2, %v1511
        %v1513 = vrot.slane %v1497, %v1512
        %v1514 = vlaneseq
        %v1515 = vshrl.u32 %v1514, 7
        %v1516 = vsub.s32 2, %v1515
        %v1517 = vrot.slane %v1501, %v1516
        %v1518 = vlaneseq
        %v1519 = vshrl.u32 %v1518, 7
        %v1520 = vsub.s32 2, %v1519
        %v1521 = vrot.slane %v1505, %v1520
        %vm1522 = vcmp.eq.s32.totalorder %v319, %v1509
        %vm1523 = vcmp.eq.s32.totalorder %v319, %v1513
        %vm1524 = vcmp.eq.s32.totalorder %v319, %v1517
        %vm1525 = vcmp.eq.s32.totalorder %v319, %v1521
        %v1528 = vlaneseq
        %v1529 = vshrl.u32 %v1528, 7
        %v1530 = vsub.s32 2, %v1529
        %v1531 = vrot.slane %v252, %v1530
        %v1532 = vlaneseq
        %v1533 = vshrl.u32 %v1532, 7
        %v1534 = vsub.s32 6, %v1533
        %v1535 = vrot.slane %v252, %v1534
        %v1536 = vlaneseq
        %v1537 = vshrl.u32 %v1536, 7
        %v1538 = vsub.s32 2, %v1537
        %v1539 = vrot.slane %v253, %v1538
        %v1540 = vlaneseq
        %v1541 = vshrl.u32 %v1540, 7
        %v1542 = vsub.s32 6, %v1541
        %v1543 = vrot.slane %v253, %v1542
        %v1548 = vlaneseq
        %v1549 = vshrl.u32 %v1548, 7
        %v1550 = vsub.s32 2, %v1549
        %v1551 = vrot.slane %v1531, %v1550
        %v1552 = vlaneseq
        %v1553 = vshrl.u32 %v1552, 7
        %v1554 = vsub.s32 2, %v1553
        %v1555 = vrot.slane %v1535, %v1554
        %v1556 = vlaneseq
        %v1557 = vshrl.u32 %v1556, 7
        %v1558 = vsub.s32 2, %v1557
        %v1559 = vrot.slane %v1539, %v1558
        %v1560 = vlaneseq
        %v1561 = vshrl.u32 %v1560, 7
        %v1562 = vsub.s32 2, %v1561
        %v1563 = vrot.slane %v1543, %v1562
        %v1564 = vsel %vm1522, %v1551, 0.0
        %v1565 = vsel %vm1523, %v1555, 0.0
        %v1566 = vsel %vm1524, %v1559, 0.0
        %v1567 = vsel %vm1525, %v1563, 0.0
        %v1568 = vadd.f32 %v1484, %v1564
        %v1569 = vadd.f32 %v1485, %v1565
        %v1570 = vadd.f32 %v1486, %v1566
        %v1571 = vadd.f32 %v1487, %v1567
        %v1576 = vcombine.low %v1568, %v1569
        %v1577 = vcombine.high %v1568, %v1569
        %v1578 = vcombine.low %v1570, %v1571
        %v1579 = vcombine.high %v1570, %v1571
        %v1581 = vunpack.c.l.s4 1966171168
        %v1582 = vunpack.c.0.s8 %v1581
        %v1583 = vlaneseq
        %v1584 = vshrl.u32 %v1583, 7
        %v1585 = vsub.s32 %v1582, %v1584
        %v1586 = vrot.slane %v1576, %v1585
        %v1588 = vunpack.c.l.s4 1966171168
        %v1589 = vunpack.c.0.s8 %v1588
        %v1590 = vlaneseq
        %v1591 = vshrl.u32 %v1590, 7
        %v1592 = vsub.s32 %v1589, %v1591
        %v1593 = vrot.slane %v1577, %v1592
        %v1595 = vunpack.c.l.s4 1966171168
        %v1596 = vunpack.c.0.s8 %v1595
        %v1597 = vlaneseq
        %v1598 = vshrl.u32 %v1597, 7
        %v1599 = vsub.s32 %v1596, %v1598
        %v1600 = vrot.slane %v1578, %v1599
        %v1602 = vunpack.c.l.s4 1966171168
        %v1603 = vunpack.c.0.s8 %v1602
        %v1604 = vlaneseq
        %v1605 = vshrl.u32 %v1604, 7
        %v1606 = vsub.s32 %v1603, %v1605
        %v1607 = vrot.slane %v1579, %v1606
        %v1608 = vcombine.low %v1586, %v1600
        %v1609 = vcombine.high %v1586, %v1600
        %v1610 = vcombine.low %v1593, %v1607
        %v1611 = vcombine.high %v1593, %v1607
        %v1613 = vunpack.c.l.s4 1966171168
        %v1614 = vunpack.c.0.s8 %v1613
        %v1615 = vlaneseq
        %v1616 = vshrl.u32 %v1615, 7
        %v1617 = vsub.s32 %v1614, %v1616
        %v1618 = vrot.slane %v1608, %v1617
        %v1620 = vunpack.c.l.s4 1966171168
        %v1621 = vunpack.c.0.s8 %v1620
        %v1622 = vlaneseq
        %v1623 = vshrl.u32 %v1622, 7
        %v1624 = vsub.s32 %v1621, %v1623
        %v1625 = vrot.slane %v1610, %v1624
        %v1627 = vunpack.c.l.s4 1966171168
        %v1628 = vunpack.c.0.s8 %v1627
        %v1629 = vlaneseq
        %v1630 = vshrl.u32 %v1629, 7
        %v1631 = vsub.s32 %v1628, %v1630
        %v1632 = vrot.slane %v1609, %v1631
        %v1634 = vunpack.c.l.s4 1966171168
        %v1635 = vunpack.c.0.s8 %v1634
        %v1636 = vlaneseq
        %v1637 = vshrl.u32 %v1636, 7
        %v1638 = vsub.s32 %v1635, %v1637
        %v1639 = vrot.slane %v1611, %v1638
        %v1640 = vcombine.high %v1618, %v1618
        %v1641 = vcombine.high %v1625, %v1625
        %v1642 = vcombine.high %v1632, %v1632
        %v1643 = vcombine.high %v1639, %v1639
        %v1644 = vlaneseq
        %v1645 = vshrl.u32 %v1644, 7
        %v1646 = vsub.s32 0, %v1645
        %v1647 = vrot.slane %v1618, %v1646
        %v1648 = vlaneseq
        %v1649 = vshrl.u32 %v1648, 7
        %v1650 = vsub.s32 1, %v1649
        %v1651 = vrot.slane %v1618, %v1650
        %v1652 = vlaneseq
        %v1653 = vshrl.u32 %v1652, 7
        %v1654 = vsub.s32 2, %v1653
        %v1655 = vrot.slane %v1618, %v1654
        %v1656 = vlaneseq
        %v1657 = vshrl.u32 %v1656, 7
        %v1658 = vsub.s32 3, %v1657
        %v1659 = vrot.slane %v1618, %v1658
        %v1660 = vlaneseq
        %v1661 = vshrl.u32 %v1660, 7
        %v1662 = vsub.s32 0, %v1661
        %v1663 = vrot.slane %v1632, %v1662
        %v1664 = vlaneseq
        %v1665 = vshrl.u32 %v1664, 7
        %v1666 = vsub.s32 1, %v1665
        %v1667 = vrot.slane %v1632, %v1666
        %v1668 = vlaneseq
        %v1669 = vshrl.u32 %v1668, 7
        %v1670 = vsub.s32 2, %v1669
        %v1671 = vrot.slane %v1632, %v1670
        %v1672 = vlaneseq
        %v1673 = vshrl.u32 %v1672, 7
        %v1674 = vsub.s32 3, %v1673
        %v1675 = vrot.slane %v1632, %v1674
        %v1676 = vlaneseq
        %v1677 = vshrl.u32 %v1676, 7
        %v1678 = vsub.s32 0, %v1677
        %v1679 = vrot.slane %v1640, %v1678
        %v1680 = vlaneseq
        %v1681 = vshrl.u32 %v1680, 7
        %v1682 = vsub.s32 1, %v1681
        %v1683 = vrot.slane %v1640, %v1682
        %v1684 = vlaneseq
        %v1685 = vshrl.u32 %v1684, 7
        %v1686 = vsub.s32 2, %v1685
        %v1687 = vrot.slane %v1640, %v1686
        %v1688 = vlaneseq
        %v1689 = vshrl.u32 %v1688, 7
        %v1690 = vsub.s32 3, %v1689
        %v1691 = vrot.slane %v1640, %v1690
        %v1692 = vlaneseq
        %v1693 = vshrl.u32 %v1692, 7
        %v1694 = vsub.s32 0, %v1693
        %v1695 = vrot.slane %v1642, %v1694
        %v1696 = vlaneseq
        %v1697 = vshrl.u32 %v1696, 7
        %v1698 = vsub.s32 1, %v1697
        %v1699 = vrot.slane %v1642, %v1698
        %v1700 = vlaneseq
        %v1701 = vshrl.u32 %v1700, 7
        %v1702 = vsub.s32 2, %v1701
        %v1703 = vrot.slane %v1642, %v1702
        %v1704 = vlaneseq
        %v1705 = vshrl.u32 %v1704, 7
        %v1706 = vsub.s32 3, %v1705
        %v1707 = vrot.slane %v1642, %v1706
        %v1708 = vlaneseq
        %v1709 = vshrl.u32 %v1708, 7
        %v1710 = vsub.s32 0, %v1709
        %v1711 = vrot.slane %v1625, %v1710
        %v1712 = vlaneseq
        %v1713 = vshrl.u32 %v1712, 7
        %v1714 = vsub.s32 1, %v1713
        %v1715 = vrot.slane %v1625, %v1714
        %v1716 = vlaneseq
        %v1717 = vshrl.u32 %v1716, 7
        %v1718 = vsub.s32 2, %v1717
        %v1719 = vrot.slane %v1625, %v1718
        %v1720 = vlaneseq
        %v1721 = vshrl.u32 %v1720, 7
        %v1722 = vsub.s32 3, %v1721
        %v1723 = vrot.slane %v1625, %v1722
        %v1724 = vlaneseq
        %v1725 = vshrl.u32 %v1724, 7
        %v1726 = vsub.s32 0, %v1725
        %v1727 = vrot.slane %v1639, %v1726
        %v1728 = vlaneseq
        %v1729 = vshrl.u32 %v1728, 7
        %v1730 = vsub.s32 1, %v1729
        %v1731 = vrot.slane %v1639, %v1730
        %v1732 = vlaneseq
        %v1733 = vshrl.u32 %v1732, 7
        %v1734 = vsub.s32 2, %v1733
        %v1735 = vrot.slane %v1639, %v1734
        %v1736 = vlaneseq
        %v1737 = vshrl.u32 %v1736, 7
        %v1738 = vsub.s32 3, %v1737
        %v1739 = vrot.slane %v1639, %v1738
        %v1740 = vlaneseq
        %v1741 = vshrl.u32 %v1740, 7
        %v1742 = vsub.s32 0, %v1741
        %v1743 = vrot.slane %v1641, %v1742
        %v1744 = vlaneseq
        %v1745 = vshrl.u32 %v1744, 7
        %v1746 = vsub.s32 1, %v1745
        %v1747 = vrot.slane %v1641, %v1746
        %v1748 = vlaneseq
        %v1749 = vshrl.u32 %v1748, 7
        %v1750 = vsub.s32 2, %v1749
        %v1751 = vrot.slane %v1641, %v1750
        %v1752 = vlaneseq
        %v1753 = vshrl.u32 %v1752, 7
        %v1754 = vsub.s32 3, %v1753
        %v1755 = vrot.slane %v1641, %v1754
        %v1756 = vlaneseq
        %v1757 = vshrl.u32 %v1756, 7
        %v1758 = vsub.s32 0, %v1757
        %v1759 = vrot.slane %v1643, %v1758
        %v1760 = vlaneseq
        %v1761 = vshrl.u32 %v1760, 7
        %v1762 = vsub.s32 1, %v1761
        %v1763 = vrot.slane %v1643, %v1762
        %v1764 = vlaneseq
        %v1765 = vshrl.u32 %v1764, 7
        %v1766 = vsub.s32 2, %v1765
        %v1767 = vrot.slane %v1643, %v1766
        %v1768 = vlaneseq
        %v1769 = vshrl.u32 %v1768, 7
        %v1770 = vsub.s32 3, %v1769
        %v1771 = vrot.slane %v1643, %v1770
        %v1804 = vmul.f32 %v1297, %v1647
        %v1805 = vmul.f32 %v1299, %v1651
        %v1806 = vmul.f32 %v1370, %v1655
        %v1807 = vmul.f32 %v1372, %v1659
        %v1808 = vmul.f32 %v1301, %v1663
        %v1809 = vmul.f32 %v1303, %v1667
        %v1810 = vmul.f32 %v1374, %v1671
        %v1811 = vmul.f32 %v1376, %v1675
        %v1812 = vmul.f32 %v1307, %v1679
        %v1813 = vmul.f32 %v1309, %v1683
        %v1814 = vmul.f32 %v1380, %v1687
        %v1815 = vmul.f32 %v1382, %v1691
        %v1816 = vmul.f32 %v1311, %v1695
        %v1817 = vmul.f32 %v1313, %v1699
        %v1818 = vmul.f32 %v1384, %v1703
        %v1819 = vmul.f32 %v1386, %v1707
        %v1820 = vmul.f32 %v1317, %v1711
        %v1821 = vmul.f32 %v1319, %v1715
        %v1822 = vmul.f32 %v1390, %v1719
        %v1823 = vmul.f32 %v1392, %v1723
        %v1824 = vmul.f32 %v1321, %v1727
        %v1825 = vmul.f32 %v1323, %v1731
        %v1826 = vmul.f32 %v1394, %v1735
        %v1827 = vmul.f32 %v1396, %v1739
        %v1828 = vmul.f32 %v1327, %v1743
        %v1829 = vmul.f32 %v1329, %v1747
        %v1830 = vmul.f32 %v1400, %v1751
        %v1831 = vmul.f32 %v1402, %v1755
        %v1832 = vmul.f32 %v1331, %v1759
        %v1833 = vmul.f32 %v1333, %v1763
        %v1834 = vmul.f32 %v1404, %v1767
        %v1835 = vmul.f32 %v1406, %v1771
        %v1836 = vadd.f32 %v1804, %v1808
        %v1837 = vadd.f32 %v1836, %v1812
        %v1838 = vadd.f32 %v1837, %v1816
        %v1839 = vadd.f32 %v1838, %v1820
        %v1840 = vadd.f32 %v1839, %v1824
        %v1841 = vadd.f32 %v1840, %v1828
        %v1842 = vadd.f32 %v1841, %v1832
        %v1843 = vadd.f32 %v1805, %v1809
        %v1844 = vadd.f32 %v1843, %v1813
        %v1845 = vadd.f32 %v1844, %v1817
        %v1846 = vadd.f32 %v1845, %v1821
        %v1847 = vadd.f32 %v1846, %v1825
        %v1848 = vadd.f32 %v1847, %v1829
        %v1849 = vadd.f32 %v1848, %v1833
        %v1850 = vadd.f32 %v1806, %v1810
        %v1851 = vadd.f32 %v1850, %v1814
        %v1852 = vadd.f32 %v1851, %v1818
        %v1853 = vadd.f32 %v1852, %v1822
        %v1854 = vadd.f32 %v1853, %v1826
        %v1855 = vadd.f32 %v1854, %v1830
        %v1856 = vadd.f32 %v1855, %v1834
        %v1857 = vadd.f32 %v1807, %v1811
        %v1858 = vadd.f32 %v1857, %v1815
        %v1859 = vadd.f32 %v1858, %v1819
        %v1860 = vadd.f32 %v1859, %v1823
        %v1861 = vadd.f32 %v1860, %v1827
        %v1862 = vadd.f32 %v1861, %v1831
        %v1863 = vadd.f32 %v1862, %v1835
        %v1864 = vadd.f32 %v1842, %v1849
        %v1865 = vadd.f32 %v1864, %v1856
        %v1866 = vadd.f32 %v1865, %v1863
        %1867 = vst [vmem:[%s234] sm:$0xff] %v1866
        %s1868 = sand.u32 %s111, 1
        %s1869 = scalar_lea.sflag [#allocation4], %s1868
        %s1870 = sand.u32 %s111, 1
        %s1871 = smul.addr %s1870, 8
        %s1872 = scalar_lea.vmem [#allocation7], %s1871
        // Predicated region
        $region37: #{tpu_custom_call.1} parent=27 // pred_check
          %p1873 = pneg %p121
        $region38: #{tpu_custom_call.1} parent=27 // pred_check_branch
          %1875 = sbr.rel (%p1873) target = $region40
        $region39: #{tpu_custom_call.1} parent=27 // pred_region
          %s1877 = ssub.s32 128, 128
          %1878 = vsyncadd %s1869, %s1877
          %s1879 = sadd.s32 %s29, %s28
          %s1880 = smul.addr %s27, 4
          %s1881 = sadd.s32 %s1879, %s1880
          %s1882 = smul.addr %s1881, 128
          %s1883 = scalar_lea.hbm %s2, %s1882
          %s1885 = sshll.u32 %s1872, 4
          %s1886 = int_to_ptr.vmem [resolvable:$true] %s1885
          %1888 = dma.vmem_to_hbm [thread:$0]  %s1886, 128, %s1883, %s1869
        $region40: #{tpu_custom_call.1} parent=27 // pred_fallthru
          _
      $region28: #{tpu_custom_call.1} parent=5 // pred_fallthru
        _
      %p1889 = scmp.le.s32.totalorder 2, %s17
      // Predicated region
      $region41: #{tpu_custom_call.1} parent=5 // pred_check
        %p1890 = pneg %p1889
      $region42: #{tpu_custom_call.1} parent=5 // pred_check_branch
        %1892 = sbr.rel (%p1890) target = $region44
      $region43: #{tpu_custom_call.1} parent=5 // pred_region
        %s1893 = ssub.s32 %s17, 2
        // Predicated region
        $region45: #{tpu_custom_call.1} parent=43 // pred_check
          %p1894 = pneg %p127
        $region46: #{tpu_custom_call.1} parent=43 // pred_check_branch
          %1896 = sbr.rel (%p1894) target = $region48
        $region47: #{tpu_custom_call.1} parent=43 // pred_region
          %s1897 = sand.u32 %s112, 1
          %s1898 = scalar_lea.sflag [#allocation4], %s1897
          %s1899 = sand.u32 %s112, 1
          %s1900 = smul.addr %s1899, 8
          %s1901 = scalar_lea.vmem [#allocation7], %s1900
          %1902 = dma.done %s1898, 128
        $region48: #{tpu_custom_call.1} parent=43 // pred_fallthru
          _
      $region44: #{tpu_custom_call.1} parent=5 // pred_fallthru
        _
    $region6: #{tpu_custom_call.1} parent=1 // loop_footer
      %s21 = sadd.s32 1, %s17
    $region7: #{tpu_custom_call.1} parent=1 // loop_footer_branch
      %16 = sbr.rel target = $region3
    $region8: #{tpu_custom_call.1} parent=1 // loop_exit
      _
    %1903 = vsyncpa [#allocation3], 1
    %s1904 = scalar_lea.sflag [#allocation3], 1
    %1905 = vsyncpa %s1904, 1
    %1906 = vsyncpa [#allocation6], 1
    %s1907 = scalar_lea.sflag [#allocation6], 1
    %1908 = vsyncpa %s1907, 1
    %1909 = vsyncpa [#allocation4], 1
    %s1910 = scalar_lea.sflag [#allocation4], 1
    %1911 = vsyncpa %s1910, 1

</llo_original>
